<compile_context>
chip_gen: v7x
topology: tpu7x:2x2x1
jax: 0.10.0
libtpu: 0.0.40
codegen_flags: <defaults>
</compile_context>

<pallas_src>
import functools

import jax
import jax.numpy as jnp
import numpy as np
from jax import lax
from jax.experimental import pallas as pl
from jax.experimental.pallas import tpu as pltpu


def _fused_resconv_kernel(x_ref,
                          wa_ref, ba_ref, pa_ref,
                          wb_ref, bb_ref, pb_ref,
                          wc_ref, bc_ref, pc_ref,
                          o_ref,
                          *, H, BH):
    """One grid step processes B_blk images stacked along the row axis.

    x_ref : (BH, W*Cin)      lane-flattened NHWC rows, BH = B_blk * H
    w*_ref: (3, K, W*Cout)   bf16 banded block weights (one matrix per dy tap)
    b*_ref: (1, W*Cout)      f32 bias row (per-channel value tiled along W)
    p*_ref: (1, W*Cout)      f32 PReLU slope row
    o_ref : (3, BH, W*Cout)  layer a/b/c outputs (lane-dense stores)
    """
    # Image-boundary masks: row r is the first / last row of its image when
    # (r mod H) == 0 / H-1, so the neighbour-row tap there is the implicit
    # zero padding and must be dropped.  Built once per step, reused 3x.
    row = lax.broadcasted_iota(jnp.int32, (BH, 1), 0)
    rmod = row % H
    keep_top = (rmod != 0).astype(jnp.float32)
    keep_bot = (rmod != H - 1).astype(jnp.float32)

    def conv_prelu(lhs16, w_ref, b_ref, p_ref):
        # 3x3 conv as 3 banded matmuls over the unpadded row stack.  The W
        # halo (pad=1 along width) is encoded in the banded weights; the H
        # halo is handled by rolling the dy=0/dy=2 partial results one row
        # (XLU) and masking the image-boundary rows (VPU).
        t0 = jnp.dot(lhs16, w_ref[0], preferred_element_type=jnp.float32)
        t1 = jnp.dot(lhs16, w_ref[1], preferred_element_type=jnp.float32)
        t2 = jnp.dot(lhs16, w_ref[2], preferred_element_type=jnp.float32)
        y = (pltpu.roll(t0, 1, axis=0) * keep_top          # row r-1 tap
             + t1                                          # row r   tap
             + pltpu.roll(t2, BH - 1, axis=0) * keep_bot   # row r+1 tap
             + b_ref[...])
        return jnp.where(y >= 0.0, y, p_ref[...] * y)      # PReLU (f32)

    # Layer a computes straight from the input block (no staging copy, no
    # padded scratch, nothing zeroed).
    a_act = conv_prelu(x_ref[...].astype(jnp.bfloat16), wa_ref, ba_ref, pa_ref)
    o_ref[0] = a_act.astype(o_ref.dtype)

    b_act = conv_prelu(a_act.astype(jnp.bfloat16), wb_ref, bb_ref, pb_ref)
    o_ref[1] = b_act.astype(o_ref.dtype)

    c_act = conv_prelu(b_act.astype(jnp.bfloat16), wc_ref, bc_ref, pc_ref)
    o_ref[2] = c_act.astype(o_ref.dtype)


def _banded_weights(w_hwio, W):
    """Fold a 3x3 HWIO conv weight (3, 3, Cin, Cout) into three banded block
    matrices of shape (W*Cin, W*Cout), one per kernel row dy.  The dx column
    shifts and the implicit zero padding at the W edges are encoded in the
    band, so each dy tap becomes a single lane-dense matmul in the kernel."""
    KH, KW, Cin, Cout = w_hwio.shape
    mats = []
    for dy in range(KH):
        m = jnp.zeros((W, Cin, W, Cout), w_hwio.dtype)
        for dx in range(KW):
            # sel[w_in, w_out] = 1  iff  w_in == w_out + (dx - 1)
            sel = jnp.eye(W, W, k=1 - dx, dtype=w_hwio.dtype)
            m = m + sel[:, None, :, None] * w_hwio[dy, dx][None, :, None, :]
        mats.append(m.reshape(W * Cin, W * Cout))
    return jnp.stack(mats, axis=0)      # (3, W*Cin, W*Cout)


def prepare_params(params, W):
    """Build kernel-ready parameters ONCE per parameter set (cache and reuse
    across forward calls): bf16 banded weights + f32 bias/PReLU lane rows."""
    def tiled(v):                        # (C,) -> (1, W*C) lane-dense row
        return jnp.tile(v, W).reshape(1, -1).astype(jnp.float32)

    return {
        "wa": _banded_weights(params["wa"], W).astype(jnp.bfloat16),
        "wb": _banded_weights(params["wb"], W).astype(jnp.bfloat16),
        "wc": _banded_weights(params["wc"], W).astype(jnp.bfloat16),
        "ba": tiled(params["ba"]), "pa": tiled(params["pa"]),
        "bb": tiled(params["bb"]), "pb": tiled(params["pb"]),
        "bc": tiled(params["bc"]), "pc": tiled(params["pc"]),
    }


def _pick_batch_block(N, H, target_rows=256):
    """Images per grid step: fill the MXU M dimension (~128 rows on v5e,
    >=256 on v6e/v7x) while keeping B_blk a divisor of N."""
    b = max(1, min(N, target_rows // H))
    while N % b:
        b -= 1
    return b


def res_conv_block(x_nchw, prepped):
    """ResConvBlock forward: (N, In_D, H, W) -> (N, 3*Out_D, H, W)."""
    N, Cin, H, W = x_nchw.shape
    Cout = prepped["ba"].shape[1] // W
    dt = x_nchw.dtype

    B_blk = _pick_batch_block(N, H)
    BH = B_blk * H
    wcin, wcout = W * Cin, W * Cout

    # NCHW -> lane-flattened row stack (N*H, W*Cin).  One XLA transpose at
    # each API boundary is the only HBM layout traffic.
    x2 = jnp.transpose(x_nchw, (0, 2, 3, 1)).reshape(N * H, wcin)

    kernel = functools.partial(_fused_resconv_kernel, H=H, BH=BH)
    vec_spec = pl.BlockSpec((1, wcout), lambda n: (0, 0))

    # Explicit VMEM budget from the actual buffer sum (scoped default sits
    # well below physical VMEM; keep headroom for v7x's 64 MiB).
    buf_bytes = (2 * BH * wcin * 4                          # x blocks (dbl-buffered)
                 + 2 * 3 * BH * wcout * 4                   # output blocks
                 + 2 * 3 * (wcin + 2 * wcout) * wcout * 2   # bf16 banded weights
                 + 2 * 6 * wcout * 4                        # bias / PReLU rows
                 + 10 * BH * wcout * 4)                     # in-kernel intermediates
    vmem_limit = int(min(max(2 * buf_bytes, 16 << 20), 32 << 20))

    # TODO(synk): for N=1 or very large H*W, add a W-tile (or H-row) "parallel"
    # grid axis with a halo so v7x's second TensorCore gets work and the O(W^2)
    # banded weights stay inside its 64 MiB VMEM; at that point also switch the
    # weight specs to pipeline_mode=pl.Buffered(1).
    out = pl.pallas_call(
        kernel,
        out_shape=jax.ShapeDtypeStruct((3, N * H, wcout), dt),
        grid_spec=pltpu.PrefetchScalarGridSpec(
            num_scalar_prefetch=0,
            grid=(N // B_blk,),
            in_specs=[
                pl.BlockSpec((BH, wcin), lambda n: (n, 0)),            # x rows
                pl.BlockSpec((3, wcin, wcout), lambda n: (0, 0, 0)),   # wa
                vec_spec, vec_spec,                                    # ba, pa
                pl.BlockSpec((3, wcout, wcout), lambda n: (0, 0, 0)),  # wb
                vec_spec, vec_spec,                                    # bb, pb
                pl.BlockSpec((3, wcout, wcout), lambda n: (0, 0, 0)),  # wc
                vec_spec, vec_spec,                                    # bc, pc
            ],
            out_specs=pl.BlockSpec((3, BH, wcout), lambda n: (0, n, 0)),
        ),
        compiler_params=pltpu.CompilerParams(
            dimension_semantics=("parallel",),
            vmem_limit_bytes=vmem_limit),
    )(x2, prepped["wa"], prepped["ba"], prepped["pa"],
      prepped["wb"], prepped["bb"], prepped["pb"],
      prepped["wc"], prepped["bc"], prepped["pc"])

    # (3, N*H, W*Cout) -> NCHW concat (N, 3*Cout, H, W); channel order matches
    # torch.cat([a, b, c], dim=1).  Single fused XLA reshape+transpose pass.
    out = out.reshape(3, N, H, W, Cout).transpose(1, 0, 4, 2, 3)
    return out.reshape(N, 3 * Cout, H, W)


def init_params(key, in_d, out_d):
    """Deterministic parameter init (shapes match the PyTorch module)."""
    ks = jax.random.split(key, 6)

    def conv_w(k, cin, cout):
        # torch layout is (Cout, Cin, 3, 3); kernel wants HWIO (3, 3, Cin, Cout)
        w_oihw = jax.random.normal(k, (cout, cin, 3, 3), jnp.float32) * 0.1
        return jnp.transpose(w_oihw, (2, 3, 1, 0))

    def conv_b(k, cout):
        return jax.random.normal(k, (cout,), jnp.float32) * 0.05

    prelu = jnp.full((out_d,), 0.25, jnp.float32)  # PyTorch PReLU default
    return {
        "wa": conv_w(ks[0], in_d, out_d), "ba": conv_b(ks[1], out_d), "pa": prelu,
        "wb": conv_w(ks[2], out_d, out_d), "bb": conv_b(ks[3], out_d), "pb": prelu,
        "wc": conv_w(ks[4], out_d, out_d), "bc": conv_b(ks[5], out_d), "pc": prelu,
    }


def _reference_layer(x_nhwc, w_hwio, bias, alpha):
    """Pure-JAX reference for one conv+PReLU layer (correctness check)."""
    y = lax.conv_general_dilated(
        x_nhwc, w_hwio, window_strides=(1, 1), padding=((1, 1), (1, 1)),
        dimension_numbers=("NHWC", "HWIO", "NHWC"),
        precision=lax.Precision.HIGHEST)
    y = y + bias[None, None, None, :]
    return jnp.where(y >= 0.0, y, alpha[None, None, None, :] * y)


def _reference_block(x_nchw, params):
    x = jnp.transpose(x_nchw, (0, 2, 3, 1))
    a = _reference_layer(x, params["wa"], params["ba"], params["pa"])
    b = _reference_layer(a, params["wb"], params["bb"], params["pb"])
    c = _reference_layer(b, params["wc"], params["bc"], params["pc"])
    out = jnp.concatenate([a, b, c], axis=-1)
    return jnp.transpose(out, (0, 3, 1, 2))


if __name__ == "__main__":
    IN_D, OUT_D = 4, 8
    N, H, W = 2, 16, 16

    key = jax.random.PRNGKey(0)
    kx, kp = jax.random.split(key)
    x = jax.random.normal(kx, (N, IN_D, H, W), jnp.float32)  # NCHW like PyTorch
    params = init_params(kp, IN_D, OUT_D)

    prepped = prepare_params(params, W)      # built once, reused across calls
    fwd = jax.jit(res_conv_block)
    out = jax.block_until_ready(fwd(x, prepped))
    assert out.shape == (N, 3 * OUT_D, H, W), out.shape

    ref = jax.block_until_ready(_reference_block(x, params))
    # bf16 MXU operands with f32 accumulation -> relaxed tolerance against the
    # f32 lax.conv reference (errors of a real indexing bug would be O(0.1-1)).
    if not np.allclose(np.asarray(out), np.asarray(ref), atol=5e-2, rtol=5e-2):
        max_err = float(np.max(np.abs(np.asarray(out) - np.asarray(ref))))
        raise AssertionError(
            f"Pallas kernel output does not match JAX reference (max err {max_err})")

    print("KERNEL_OK")
</pallas_src>

<mosaic_0001>
module attributes {stable_mosaic.version = 11 : i64} {
  func.func @_fused_resconv_kernel(%arg0: i32, %arg1: memref<32x64xf32, #tpu.memory_space<vmem>>, %arg2: memref<3x64x128xbf16, #tpu.memory_space<vmem>>, %arg3: memref<1x128xf32, #tpu.memory_space<vmem>>, %arg4: memref<1x128xf32, #tpu.memory_space<vmem>>, %arg5: memref<3x128x128xbf16, #tpu.memory_space<vmem>>, %arg6: memref<1x128xf32, #tpu.memory_space<vmem>>, %arg7: memref<1x128xf32, #tpu.memory_space<vmem>>, %arg8: memref<3x128x128xbf16, #tpu.memory_space<vmem>>, %arg9: memref<1x128xf32, #tpu.memory_space<vmem>>, %arg10: memref<1x128xf32, #tpu.memory_space<vmem>>, %arg11: memref<3x32x128xf32, #tpu.memory_space<vmem>>) attributes {dimension_semantics = [#tpu.dimension_semantics<parallel>], iteration_bounds = array<i64: 1>, scalar_prefetch = 0 : i64, scratch_operands = 0 : i64, tpu.core_type = #tpu.core_type<tc>, window_params = [{transform_indices = @transform_0, window_bounds = array<i64: 32, 64>}, {pipeline_mode = #tpu.pipeline_mode<synchronous>, transform_indices = @transform_1, window_bounds = array<i64: 3, 64, 128>}, {pipeline_mode = #tpu.pipeline_mode<synchronous>, transform_indices = @transform_2, window_bounds = array<i64: 1, 128>}, {pipeline_mode = #tpu.pipeline_mode<synchronous>, transform_indices = @transform_3, window_bounds = array<i64: 1, 128>}, {pipeline_mode = #tpu.pipeline_mode<synchronous>, transform_indices = @transform_4, window_bounds = array<i64: 3, 128, 128>}, {pipeline_mode = #tpu.pipeline_mode<synchronous>, transform_indices = @transform_5, window_bounds = array<i64: 1, 128>}, {pipeline_mode = #tpu.pipeline_mode<synchronous>, transform_indices = @transform_6, window_bounds = array<i64: 1, 128>}, {pipeline_mode = #tpu.pipeline_mode<synchronous>, transform_indices = @transform_7, window_bounds = array<i64: 3, 128, 128>}, {pipeline_mode = #tpu.pipeline_mode<synchronous>, transform_indices = @transform_8, window_bounds = array<i64: 1, 128>}, {pipeline_mode = #tpu.pipeline_mode<synchronous>, transform_indices = @transform_9, window_bounds = array<i64: 1, 128>}, {transform_indices = @transform_10, window_bounds = array<i64: 3, 32, 128>}]} {
    %0 = tpu.iota {dimensions = array<i32: 0>} : vector<32x1xi32>
    %c16_i32 = arith.constant 16 : i32
    %c0_i32 = arith.constant 0 : i32
    %1 = arith.cmpi eq, %c16_i32, %c0_i32 : i32
    %c1_i32 = arith.constant 1 : i32
    %2 = arith.select %1, %c1_i32, %c16_i32 : i32
    %3 = vector.broadcast %2 : i32 to vector<32x1xi32>
    %4 = arith.remsi %0, %3 : vector<32x1xi32>
    %c0_i32_0 = arith.constant 0 : i32
    %5 = vector.broadcast %c0_i32_0 : i32 to vector<32x1xi32>
    %6 = arith.cmpi ne, %4, %5 : vector<32x1xi32>
    %c0_i32_1 = arith.constant 0 : i32
    %7 = vector.broadcast %c0_i32_1 : i32 to vector<32x1xi32>
    %8 = arith.cmpi slt, %4, %7 : vector<32x1xi32>
    %c0_i32_2 = arith.constant 0 : i32
    %9 = arith.cmpi slt, %2, %c0_i32_2 : i32
    %10 = vector.broadcast %9 : i1 to vector<32x1xi1>
    %11 = vector.broadcast %10 : vector<32x1xi1> to vector<32x1xi1>
    %12 = arith.xori %8, %11 : vector<32x1xi1>
    %13 = arith.andi %12, %6 : vector<32x1xi1>
    %14 = vector.broadcast %2 : i32 to vector<32x1xi32>
    %15 = arith.addi %4, %14 : vector<32x1xi32>
    %16 = arith.select %13, %15, %4 : vector<32x1xi1>, vector<32x1xi32>
    %c0_i32_3 = arith.constant 0 : i32
    %17 = vector.broadcast %c0_i32_3 : i32 to vector<32x1xi32>
    %18 = arith.cmpi ne, %16, %17 : vector<32x1xi32>
    %19 = arith.extui %18 : vector<32x1xi1> to vector<32x1xi32>
    %20 = arith.sitofp %19 : vector<32x1xi32> to vector<32x1xf32>
    %c15_i32 = arith.constant 15 : i32
    %21 = vector.broadcast %c15_i32 : i32 to vector<32x1xi32>
    %22 = arith.cmpi ne, %16, %21 : vector<32x1xi32>
    %23 = arith.extui %22 : vector<32x1xi1> to vector<32x1xi32>
    %24 = arith.sitofp %23 : vector<32x1xi32> to vector<32x1xf32>
    %c0 = arith.constant 0 : index
    %c0_4 = arith.constant 0 : index
    %25 = vector.load %arg1[%c0, %c0_4] : memref<32x64xf32, #tpu.memory_space<vmem>>, vector<32x64xf32>
    %26 = arith.truncf %25 : vector<32x64xf32> to vector<32x64xbf16>
    %c0_5 = arith.constant 0 : index
    %c0_6 = arith.constant 0 : index
    %c0_7 = arith.constant 0 : index
    %27 = vector.load %arg2[%c0_5, %c0_6, %c0_7] : memref<3x64x128xbf16, #tpu.memory_space<vmem>>, vector<1x64x128xbf16>
    %28 = vector.shape_cast %27 : vector<1x64x128xbf16> to vector<64x128xbf16>
    %cst = arith.constant dense<0.000000e+00> : vector<32x128xf32>
    %29 = tpu.matmul %26, %28, %cst {dimension_numbers = #tpu.dot_dimension_numbers<[1], [0], [0], [1], [0, 0, 1, 1], [], []>} : vector<32x64xbf16>, vector<64x128xbf16>, vector<32x128xf32> -> vector<32x128xf32>
    %c1 = arith.constant 1 : index
    %c0_8 = arith.constant 0 : index
    %c0_9 = arith.constant 0 : index
    %30 = vector.load %arg2[%c1, %c0_8, %c0_9] : memref<3x64x128xbf16, #tpu.memory_space<vmem>>, vector<1x64x128xbf16>
    %31 = vector.shape_cast %30 : vector<1x64x128xbf16> to vector<64x128xbf16>
    %cst_10 = arith.constant dense<0.000000e+00> : vector<32x128xf32>
    %32 = tpu.matmul %26, %31, %cst_10 {dimension_numbers = #tpu.dot_dimension_numbers<[1], [0], [0], [1], [0, 0, 1, 1], [], []>} : vector<32x64xbf16>, vector<64x128xbf16>, vector<32x128xf32> -> vector<32x128xf32>
    %c2 = arith.constant 2 : index
    %c0_11 = arith.constant 0 : index
    %c0_12 = arith.constant 0 : index
    %33 = vector.load %arg2[%c2, %c0_11, %c0_12] : memref<3x64x128xbf16, #tpu.memory_space<vmem>>, vector<1x64x128xbf16>
    %34 = vector.shape_cast %33 : vector<1x64x128xbf16> to vector<64x128xbf16>
    %cst_13 = arith.constant dense<0.000000e+00> : vector<32x128xf32>
    %35 = tpu.matmul %26, %34, %cst_13 {dimension_numbers = #tpu.dot_dimension_numbers<[1], [0], [0], [1], [0, 0, 1, 1], [], []>} : vector<32x64xbf16>, vector<64x128xbf16>, vector<32x128xf32> -> vector<32x128xf32>
    %c1_i32_14 = arith.constant 1 : i32
    %36 = tpu.dynamic_rotate %29 by %c1_i32_14 dim 0 : vector<32x128xf32>, i32 -> vector<32x128xf32>
    %37 = vector.broadcast %20 : vector<32x1xf32> to vector<32x128xf32>
    %38 = arith.mulf %36, %37 : vector<32x128xf32>
    %39 = arith.addf %38, %32 : vector<32x128xf32>
    %c31_i32 = arith.constant 31 : i32
    %40 = tpu.dynamic_rotate %35 by %c31_i32 dim 0 : vector<32x128xf32>, i32 -> vector<32x128xf32>
    %41 = vector.broadcast %24 : vector<32x1xf32> to vector<32x128xf32>
    %42 = arith.mulf %40, %41 : vector<32x128xf32>
    %43 = arith.addf %39, %42 : vector<32x128xf32>
    %c0_15 = arith.constant 0 : index
    %c0_16 = arith.constant 0 : index
    %44 = vector.load %arg3[%c0_15, %c0_16] : memref<1x128xf32, #tpu.memory_space<vmem>>, vector<1x128xf32>
    %45 = vector.broadcast %44 : vector<1x128xf32> to vector<32x128xf32>
    %46 = arith.addf %43, %45 : vector<32x128xf32>
    %cst_17 = arith.constant 0.000000e+00 : f32
    %47 = vector.broadcast %cst_17 : f32 to vector<32x128xf32>
    %48 = arith.cmpf oge, %46, %47 : vector<32x128xf32>
    %c0_18 = arith.constant 0 : index
    %c0_19 = arith.constant 0 : index
    %49 = vector.load %arg4[%c0_18, %c0_19] : memref<1x128xf32, #tpu.memory_space<vmem>>, vector<1x128xf32>
    %50 = vector.broadcast %49 : vector<1x128xf32> to vector<32x128xf32>
    %51 = arith.mulf %50, %46 : vector<32x128xf32>
    %52 = arith.select %48, %46, %51 : vector<32x128xi1>, vector<32x128xf32>
    %c0_20 = arith.constant 0 : index
    %c0_21 = arith.constant 0 : index
    %c0_22 = arith.constant 0 : index
    %53 = vector.load %arg11[%c0_20, %c0_21, %c0_22] : memref<3x32x128xf32, #tpu.memory_space<vmem>>, vector<1x32x128xf32>
    %54 = vector.shape_cast %53 : vector<1x32x128xf32> to vector<32x128xf32>
    %55 = vector.shape_cast %52 : vector<32x128xf32> to vector<1x32x128xf32>
    tpu.vector_store %arg11[%c0_20, %c0_21, %c0_22], %55 {strides = array<i32>} : memref<3x32x128xf32, #tpu.memory_space<vmem>>, vector<1x32x128xf32>,
    %56 = arith.truncf %52 : vector<32x128xf32> to vector<32x128xbf16>
    %c0_23 = arith.constant 0 : index
    %c0_24 = arith.constant 0 : index
    %c0_25 = arith.constant 0 : index
    %57 = vector.load %arg5[%c0_23, %c0_24, %c0_25] : memref<3x128x128xbf16, #tpu.memory_space<vmem>>, vector<1x128x128xbf16>
    %58 = vector.shape_cast %57 : vector<1x128x128xbf16> to vector<128x128xbf16>
    %cst_26 = arith.constant dense<0.000000e+00> : vector<32x128xf32>
    %59 = tpu.matmul %56, %58, %cst_26 {dimension_numbers = #tpu.dot_dimension_numbers<[1], [0], [0], [1], [0, 0, 1, 1], [], []>} : vector<32x128xbf16>, vector<128x128xbf16>, vector<32x128xf32> -> vector<32x128xf32>
    %c1_27 = arith.constant 1 : index
    %c0_28 = arith.constant 0 : index
    %c0_29 = arith.constant 0 : index
    %60 = vector.load %arg5[%c1_27, %c0_28, %c0_29] : memref<3x128x128xbf16, #tpu.memory_space<vmem>>, vector<1x128x128xbf16>
    %61 = vector.shape_cast %60 : vector<1x128x128xbf16> to vector<128x128xbf16>
    %cst_30 = arith.constant dense<0.000000e+00> : vector<32x128xf32>
    %62 = tpu.matmul %56, %61, %cst_30 {dimension_numbers = #tpu.dot_dimension_numbers<[1], [0], [0], [1], [0, 0, 1, 1], [], []>} : vector<32x128xbf16>, vector<128x128xbf16>, vector<32x128xf32> -> vector<32x128xf32>
    %c2_31 = arith.constant 2 : index
    %c0_32 = arith.constant 0 : index
    %c0_33 = arith.constant 0 : index
    %63 = vector.load %arg5[%c2_31, %c0_32, %c0_33] : memref<3x128x128xbf16, #tpu.memory_space<vmem>>, vector<1x128x128xbf16>
    %64 = vector.shape_cast %63 : vector<1x128x128xbf16> to vector<128x128xbf16>
    %cst_34 = arith.constant dense<0.000000e+00> : vector<32x128xf32>
    %65 = tpu.matmul %56, %64, %cst_34 {dimension_numbers = #tpu.dot_dimension_numbers<[1], [0], [0], [1], [0, 0, 1, 1], [], []>} : vector<32x128xbf16>, vector<128x128xbf16>, vector<32x128xf32> -> vector<32x128xf32>
    %c1_i32_35 = arith.constant 1 : i32
    %66 = tpu.dynamic_rotate %59 by %c1_i32_35 dim 0 : vector<32x128xf32>, i32 -> vector<32x128xf32>
    %67 = vector.broadcast %20 : vector<32x1xf32> to vector<32x128xf32>
    %68 = arith.mulf %66, %67 : vector<32x128xf32>
    %69 = arith.addf %68, %62 : vector<32x128xf32>
    %c31_i32_36 = arith.constant 31 : i32
    %70 = tpu.dynamic_rotate %65 by %c31_i32_36 dim 0 : vector<32x128xf32>, i32 -> vector<32x128xf32>
    %71 = vector.broadcast %24 : vector<32x1xf32> to vector<32x128xf32>
    %72 = arith.mulf %70, %71 : vector<32x128xf32>
    %73 = arith.addf %69, %72 : vector<32x128xf32>
    %c0_37 = arith.constant 0 : index
    %c0_38 = arith.constant 0 : index
    %74 = vector.load %arg6[%c0_37, %c0_38] : memref<1x128xf32, #tpu.memory_space<vmem>>, vector<1x128xf32>
    %75 = vector.broadcast %74 : vector<1x128xf32> to vector<32x128xf32>
    %76 = arith.addf %73, %75 : vector<32x128xf32>
    %cst_39 = arith.constant 0.000000e+00 : f32
    %77 = vector.broadcast %cst_39 : f32 to vector<32x128xf32>
    %78 = arith.cmpf oge, %76, %77 : vector<32x128xf32>
    %c0_40 = arith.constant 0 : index
    %c0_41 = arith.constant 0 : index
    %79 = vector.load %arg7[%c0_40, %c0_41] : memref<1x128xf32, #tpu.memory_space<vmem>>, vector<1x128xf32>
    %80 = vector.broadcast %79 : vector<1x128xf32> to vector<32x128xf32>
    %81 = arith.mulf %80, %76 : vector<32x128xf32>
    %82 = arith.select %78, %76, %81 : vector<32x128xi1>, vector<32x128xf32>
    %c1_42 = arith.constant 1 : index
    %c0_43 = arith.constant 0 : index
    %c0_44 = arith.constant 0 : index
    %83 = vector.load %arg11[%c1_42, %c0_43, %c0_44] : memref<3x32x128xf32, #tpu.memory_space<vmem>>, vector<1x32x128xf32>
    %84 = vector.shape_cast %83 : vector<1x32x128xf32> to vector<32x128xf32>
    %85 = vector.shape_cast %82 : vector<32x128xf32> to vector<1x32x128xf32>
    tpu.vector_store %arg11[%c1_42, %c0_43, %c0_44], %85 {strides = array<i32>} : memref<3x32x128xf32, #tpu.memory_space<vmem>>, vector<1x32x128xf32>,
    %86 = arith.truncf %82 : vector<32x128xf32> to vector<32x128xbf16>
    %c0_45 = arith.constant 0 : index
    %c0_46 = arith.constant 0 : index
    %c0_47 = arith.constant 0 : index
    %87 = vector.load %arg8[%c0_45, %c0_46, %c0_47] : memref<3x128x128xbf16, #tpu.memory_space<vmem>>, vector<1x128x128xbf16>
    %88 = vector.shape_cast %87 : vector<1x128x128xbf16> to vector<128x128xbf16>
    %cst_48 = arith.constant dense<0.000000e+00> : vector<32x128xf32>
    %89 = tpu.matmul %86, %88, %cst_48 {dimension_numbers = #tpu.dot_dimension_numbers<[1], [0], [0], [1], [0, 0, 1, 1], [], []>} : vector<32x128xbf16>, vector<128x128xbf16>, vector<32x128xf32> -> vector<32x128xf32>
    %c1_49 = arith.constant 1 : index
    %c0_50 = arith.constant 0 : index
    %c0_51 = arith.constant 0 : index
    %90 = vector.load %arg8[%c1_49, %c0_50, %c0_51] : memref<3x128x128xbf16, #tpu.memory_space<vmem>>, vector<1x128x128xbf16>
    %91 = vector.shape_cast %90 : vector<1x128x128xbf16> to vector<128x128xbf16>
    %cst_52 = arith.constant dense<0.000000e+00> : vector<32x128xf32>
    %92 = tpu.matmul %86, %91, %cst_52 {dimension_numbers = #tpu.dot_dimension_numbers<[1], [0], [0], [1], [0, 0, 1, 1], [], []>} : vector<32x128xbf16>, vector<128x128xbf16>, vector<32x128xf32> -> vector<32x128xf32>
    %c2_53 = arith.constant 2 : index
    %c0_54 = arith.constant 0 : index
    %c0_55 = arith.constant 0 : index
    %93 = vector.load %arg8[%c2_53, %c0_54, %c0_55] : memref<3x128x128xbf16, #tpu.memory_space<vmem>>, vector<1x128x128xbf16>
    %94 = vector.shape_cast %93 : vector<1x128x128xbf16> to vector<128x128xbf16>
    %cst_56 = arith.constant dense<0.000000e+00> : vector<32x128xf32>
    %95 = tpu.matmul %86, %94, %cst_56 {dimension_numbers = #tpu.dot_dimension_numbers<[1], [0], [0], [1], [0, 0, 1, 1], [], []>} : vector<32x128xbf16>, vector<128x128xbf16>, vector<32x128xf32> -> vector<32x128xf32>
    %c1_i32_57 = arith.constant 1 : i32
    %96 = tpu.dynamic_rotate %89 by %c1_i32_57 dim 0 : vector<32x128xf32>, i32 -> vector<32x128xf32>
    %97 = vector.broadcast %20 : vector<32x1xf32> to vector<32x128xf32>
    %98 = arith.mulf %96, %97 : vector<32x128xf32>
    %99 = arith.addf %98, %92 : vector<32x128xf32>
    %c31_i32_58 = arith.constant 31 : i32
    %100 = tpu.dynamic_rotate %95 by %c31_i32_58 dim 0 : vector<32x128xf32>, i32 -> vector<32x128xf32>
    %101 = vector.broadcast %24 : vector<32x1xf32> to vector<32x128xf32>
    %102 = arith.mulf %100, %101 : vector<32x128xf32>
    %103 = arith.addf %99, %102 : vector<32x128xf32>
    %c0_59 = arith.constant 0 : index
    %c0_60 = arith.constant 0 : index
    %104 = vector.load %arg9[%c0_59, %c0_60] : memref<1x128xf32, #tpu.memory_space<vmem>>, vector<1x128xf32>
    %105 = vector.broadcast %104 : vector<1x128xf32> to vector<32x128xf32>
    %106 = arith.addf %103, %105 : vector<32x128xf32>
    %cst_61 = arith.constant 0.000000e+00 : f32
    %107 = vector.broadcast %cst_61 : f32 to vector<32x128xf32>
    %108 = arith.cmpf oge, %106, %107 : vector<32x128xf32>
    %c0_62 = arith.constant 0 : index
    %c0_63 = arith.constant 0 : index
    %109 = vector.load %arg10[%c0_62, %c0_63] : memref<1x128xf32, #tpu.memory_space<vmem>>, vector<1x128xf32>
    %110 = vector.broadcast %109 : vector<1x128xf32> to vector<32x128xf32>
    %111 = arith.mulf %110, %106 : vector<32x128xf32>
    %112 = arith.select %108, %106, %111 : vector<32x128xi1>, vector<32x128xf32>
    %c2_64 = arith.constant 2 : index
    %c0_65 = arith.constant 0 : index
    %c0_66 = arith.constant 0 : index
    %113 = vector.load %arg11[%c2_64, %c0_65, %c0_66] : memref<3x32x128xf32, #tpu.memory_space<vmem>>, vector<1x32x128xf32>
    %114 = vector.shape_cast %113 : vector<1x32x128xf32> to vector<32x128xf32>
    %115 = vector.shape_cast %112 : vector<32x128xf32> to vector<1x32x128xf32>
    tpu.vector_store %arg11[%c2_64, %c0_65, %c0_66], %115 {strides = array<i32>} : memref<3x32x128xf32, #tpu.memory_space<vmem>>, vector<1x32x128xf32>,
    return
  }
  func.func @transform_0(%arg0: i32) -> (i32, i32) {
    %c0_i32 = arith.constant 0 : i32
    %c0_i32_0 = arith.constant 0 : i32
    return %arg0, %c0_i32 : i32, i32
  }
  func.func @transform_1(%arg0: i32) -> (i32, i32, i32) {
    %c0_i32 = arith.constant 0 : i32
    %c0_i32_0 = arith.constant 0 : i32
    %c0_i32_1 = arith.constant 0 : i32
    %c0_i32_2 = arith.constant 0 : i32
    return %c0_i32, %c0_i32_0, %c0_i32_1 : i32, i32, i32
  }
  func.func @transform_2(%arg0: i32) -> (i32, i32) {
    %c0_i32 = arith.constant 0 : i32
    %c0_i32_0 = arith.constant 0 : i32
    %c0_i32_1 = arith.constant 0 : i32
    return %c0_i32, %c0_i32_0 : i32, i32
  }
  func.func @transform_3(%arg0: i32) -> (i32, i32) {
    %c0_i32 = arith.constant 0 : i32
    %c0_i32_0 = arith.constant 0 : i32
    %c0_i32_1 = arith.constant 0 : i32
    return %c0_i32, %c0_i32_0 : i32, i32
  }
  func.func @transform_4(%arg0: i32) -> (i32, i32, i32) {
    %c0_i32 = arith.constant 0 : i32
    %c0_i32_0 = arith.constant 0 : i32
    %c0_i32_1 = arith.constant 0 : i32
    %c0_i32_2 = arith.constant 0 : i32
    return %c0_i32, %c0_i32_0, %c0_i32_1 : i32, i32, i32
  }
  func.func @transform_5(%arg0: i32) -> (i32, i32) {
    %c0_i32 = arith.constant 0 : i32
    %c0_i32_0 = arith.constant 0 : i32
    %c0_i32_1 = arith.constant 0 : i32
    return %c0_i32, %c0_i32_0 : i32, i32
  }
  func.func @transform_6(%arg0: i32) -> (i32, i32) {
    %c0_i32 = arith.constant 0 : i32
    %c0_i32_0 = arith.constant 0 : i32
    %c0_i32_1 = arith.constant 0 : i32
    return %c0_i32, %c0_i32_0 : i32, i32
  }
  func.func @transform_7(%arg0: i32) -> (i32, i32, i32) {
    %c0_i32 = arith.constant 0 : i32
    %c0_i32_0 = arith.constant 0 : i32
    %c0_i32_1 = arith.constant 0 : i32
    %c0_i32_2 = arith.constant 0 : i32
    return %c0_i32, %c0_i32_0, %c0_i32_1 : i32, i32, i32
  }
  func.func @transform_8(%arg0: i32) -> (i32, i32) {
    %c0_i32 = arith.constant 0 : i32
    %c0_i32_0 = arith.constant 0 : i32
    %c0_i32_1 = arith.constant 0 : i32
    return %c0_i32, %c0_i32_0 : i32, i32
  }
  func.func @transform_9(%arg0: i32) -> (i32, i32) {
    %c0_i32 = arith.constant 0 : i32
    %c0_i32_0 = arith.constant 0 : i32
    %c0_i32_1 = arith.constant 0 : i32
    return %c0_i32, %c0_i32_0 : i32, i32
  }
  func.func @transform_10(%arg0: i32) -> (i32, i32, i32) {
    %c0_i32 = arith.constant 0 : i32
    %c0_i32_0 = arith.constant 0 : i32
    %c0_i32_1 = arith.constant 0 : i32
    return %c0_i32, %arg0, %c0_i32_0 : i32, i32, i32
  }
}

</mosaic_0001>

<llo_original>
// kernel: res_conv_block.1
$region0: #{res_conv_block.1}
  #allocation0 [shape = 'u32[]', space=smem, size = 0x4, offset = 0x4, fixed_abs, tag = 'smem constant byte address 0x4 - core index']
  #allocation1 [shape = 'u32[144,128]{1,0:T(1,128)}', space=vmem, size = 0x12000, scoped, tag = 'internal scratch']
  %s0 = inlined_call_operand.vmem [shape: f32[32,64], index: 0, kind: input, shape index: {}]
  %s1 = inlined_call_operand.vmem [shape: bf16[3,64,128], index: 1, kind: input, shape index: {}]
  %s2 = inlined_call_operand.vmem [shape: f32[1,128], index: 2, kind: input, shape index: {}]
  %s3 = inlined_call_operand.vmem [shape: f32[1,128], index: 3, kind: input, shape index: {}]
  %s4 = inlined_call_operand.vmem [shape: bf16[3,128,128], index: 4, kind: input, shape index: {}]
  %s5 = inlined_call_operand.vmem [shape: f32[1,128], index: 5, kind: input, shape index: {}]
  %s6 = inlined_call_operand.vmem [shape: f32[1,128], index: 6, kind: input, shape index: {}]
  %s7 = inlined_call_operand.vmem [shape: bf16[3,128,128], index: 7, kind: input, shape index: {}]
  %s8 = inlined_call_operand.vmem [shape: f32[1,128], index: 8, kind: input, shape index: {}]
  %s9 = inlined_call_operand.vmem [shape: f32[1,128], index: 9, kind: input, shape index: {}]
  %s10 = inlined_call_operand.vmem [shape: f32[3,32,128], index: 10, kind: output, shape index: {}]
  %s11 = sld [smem:[#allocation0]]
  $region50: #{res_conv_block.1} parent=0
    _
  %s13 = ssub.s32 1, %s11
  %s14 = scalar_select 0, %s13, %s11
  // Predicated region
  $region2: #{res_conv_block.1} parent=0 // pred_check
    _
  $region3: #{res_conv_block.1} parent=0 // pred_check_branch
    %16 = sbr.rel (0) target = $region5
  $region4: #{res_conv_block.1} parent=0 // pred_region
    _
  $region5: #{res_conv_block.1} parent=0 // pred_fallthru
    _
  // Predicated region
  $region6: #{res_conv_block.1} parent=0 // pred_check
    _
  $region7: #{res_conv_block.1} parent=0 // pred_check_branch
    %18 = sbr.rel (0) target = $region9
  $region8: #{res_conv_block.1} parent=0 // pred_region
    _
  $region9: #{res_conv_block.1} parent=0 // pred_fallthru
    _
  // Predicated region
  $region10: #{res_conv_block.1} parent=0 // pred_check
    _
  $region11: #{res_conv_block.1} parent=0 // pred_check_branch
    %20 = sbr.rel (0) target = $region13
  $region12: #{res_conv_block.1} parent=0 // pred_region
    _
  $region13: #{res_conv_block.1} parent=0 // pred_fallthru
    _
  // Predicated region
  $region14: #{res_conv_block.1} parent=0 // pred_check
    _
  $region15: #{res_conv_block.1} parent=0 // pred_check_branch
    %22 = sbr.rel (0) target = $region17
  $region16: #{res_conv_block.1} parent=0 // pred_region
    _
  $region17: #{res_conv_block.1} parent=0 // pred_fallthru
    _
  // Predicated region
  $region18: #{res_conv_block.1} parent=0 // pred_check
    _
  $region19: #{res_conv_block.1} parent=0 // pred_check_branch
    %24 = sbr.rel (0) target = $region21
  $region20: #{res_conv_block.1} parent=0 // pred_region
    _
  $region21: #{res_conv_block.1} parent=0 // pred_fallthru
    _
  // Predicated region
  $region22: #{res_conv_block.1} parent=0 // pred_check
    _
  $region23: #{res_conv_block.1} parent=0 // pred_check_branch
    %26 = sbr.rel (0) target = $region25
  $region24: #{res_conv_block.1} parent=0 // pred_region
    _
  $region25: #{res_conv_block.1} parent=0 // pred_fallthru
    _
  // Predicated region
  $region26: #{res_conv_block.1} parent=0 // pred_check
    _
  $region27: #{res_conv_block.1} parent=0 // pred_check_branch
    %28 = sbr.rel (0) target = $region29
  $region28: #{res_conv_block.1} parent=0 // pred_region
    _
  $region29: #{res_conv_block.1} parent=0 // pred_fallthru
    _
  // Predicated region
  $region30: #{res_conv_block.1} parent=0 // pred_check
    _
  $region31: #{res_conv_block.1} parent=0 // pred_check_branch
    %30 = sbr.rel (0) target = $region33
  $region32: #{res_conv_block.1} parent=0 // pred_region
    _
  $region33: #{res_conv_block.1} parent=0 // pred_fallthru
    _
  // Predicated region
  $region34: #{res_conv_block.1} parent=0 // pred_check
    _
  $region35: #{res_conv_block.1} parent=0 // pred_check_branch
    %32 = sbr.rel (0) target = $region37
  $region36: #{res_conv_block.1} parent=0 // pred_region
    _
  $region37: #{res_conv_block.1} parent=0 // pred_fallthru
    _
  // Predicated region
  $region38: #{res_conv_block.1} parent=0 // pred_check
    _
  $region39: #{res_conv_block.1} parent=0 // pred_check_branch
    %34 = sbr.rel (0) target = $region41
  $region40: #{res_conv_block.1} parent=0 // pred_region
    _
  $region41: #{res_conv_block.1} parent=0 // pred_fallthru
    _
  %v36 = vlaneseq
  %v37 = vshrl.u32 %v36, 7
  %v38 = vadd.s32 %v37, 8
  %v39 = vadd.s32 %v37, 16
  %v40 = vadd.s32 %v37, 24
  %vm41 = vcmp.lt.s32.totalorder %v37, 0
  %v42 = vsub.s32 0, %v37
  %v43 = vsel %vm41, %v42, %v37
  %v44 = vshrl.u32 %v43, 4
  %v45 = vand.u32 %v43, 15
  %v46 = vsub.s32 0, %v45
  %v47 = vsel %vm41, %v46, %v45
  %vm48 = vcmp.lt.s32.totalorder %v38, 0
  %v49 = vsub.s32 0, %v38
  %v50 = vsel %vm48, %v49, %v38
  %v51 = vshrl.u32 %v50, 4
  %v52 = vand.u32 %v50, 15
  %v53 = vsub.s32 0, %v52
  %v54 = vsel %vm48, %v53, %v52
  %vm55 = vcmp.lt.s32.totalorder %v39, 0
  %v56 = vsub.s32 0, %v39
  %v57 = vsel %vm55, %v56, %v39
  %v58 = vshrl.u32 %v57, 4
  %v59 = vand.u32 %v57, 15
  %v60 = vsub.s32 0, %v59
  %v61 = vsel %vm55, %v60, %v59
  %vm62 = vcmp.lt.s32.totalorder %v40, 0
  %v63 = vsub.s32 0, %v40
  %v64 = vsel %vm62, %v63, %v40
  %v65 = vshrl.u32 %v64, 4
  %v66 = vand.u32 %v64, 15
  %v67 = vsub.s32 0, %v66
  %v68 = vsel %vm62, %v67, %v66
  %vm69 = vcmp.ne.s32.totalorder %v47, 0
  %vm70 = vcmp.ne.s32.totalorder %v54, 0
  %vm71 = vcmp.ne.s32.totalorder %v61, 0
  %vm72 = vcmp.ne.s32.totalorder %v68, 0
  %vm73 = vcmp.lt.s32.totalorder %v47, 0
  %vm74 = vcmp.lt.s32.totalorder %v54, 0
  %vm75 = vcmp.lt.s32.totalorder %v61, 0
  %vm76 = vcmp.lt.s32.totalorder %v68, 0
  %vm77 = vmand %vm73, %vm69
  %vm78 = vmand %vm74, %vm70
  %vm79 = vmand %vm75, %vm71
  %vm80 = vmand %vm76, %vm72
  %v81 = vadd.s32 %v47, 16
  %v82 = vadd.s32 %v54, 16
  %v83 = vadd.s32 %v61, 16
  %v84 = vadd.s32 %v68, 16
  %v85 = vsel %vm77, %v81, %v47
  %v86 = vsel %vm78, %v82, %v54
  %v87 = vsel %vm79, %v83, %v61
  %v88 = vsel %vm80, %v84, %v68
  %vm89 = vcmp.ne.s32.totalorder %v85, 0
  %vm90 = vcmp.ne.s32.totalorder %v86, 0
  %vm91 = vcmp.ne.s32.totalorder %v87, 0
  %vm92 = vcmp.ne.s32.totalorder %v88, 0
  %v93 = vsel %vm89, 1, 0
  %v94 = vsel %vm90, 1, 0
  %v95 = vsel %vm91, 1, 0
  %v96 = vsel %vm92, 1, 0
  %v97 = vcvt.s32.f32 %v93
  %v98 = vcvt.s32.f32 %v94
  %v99 = vcvt.s32.f32 %v95
  %v100 = vcvt.s32.f32 %v96
  %vm101 = vcmp.ne.s32.totalorder %v85, 15
  %vm102 = vcmp.ne.s32.totalorder %v86, 15
  %vm103 = vcmp.ne.s32.totalorder %v87, 15
  %vm104 = vcmp.ne.s32.totalorder %v88, 15
  %v105 = vsel %vm101, 1, 0
  %v106 = vsel %vm102, 1, 0
  %v107 = vsel %vm103, 1, 0
  %v108 = vsel %vm104, 1, 0
  %v109 = vcvt.s32.f32 %v105
  %v110 = vcvt.s32.f32 %v106
  %v111 = vcvt.s32.f32 %v107
  %v112 = vcvt.s32.f32 %v108
  %v113 = vld [vmem:[%s0] sm:$0xff]
  %v114 = vld [vmem:[%s0 + $0x8] sm:$0xff]
  %v115 = vld [vmem:[%s0 + $0x10] sm:$0xff]
  %v116 = vld [vmem:[%s0 + $0x18] sm:$0xff]
  %v117 = vpack.c.bf16 %v114, %v113
  %v118 = vpack.c.bf16 %v116, %v115
  %v119 = vld [vmem:[%s1] sm:$0xf]
  %v120 = vld [vmem:[%s1 + $0x4] sm:$0xf]
  %v121 = vld [vmem:[%s1 + $0x8] sm:$0xf]
  %v122 = vld [vmem:[%s1 + $0xc] sm:$0xf]
  %v123 = vld [vmem:[%s1 + $0x10] sm:$0xf]
  %v124 = vld [vmem:[%s1 + $0x14] sm:$0xf]
  %v125 = vld [vmem:[%s1 + $0x18] sm:$0xf]
  %v126 = vld [vmem:[%s1 + $0x1c] sm:$0xf]
  %v135 = vunpack.c.l.b16 %v119
  %v136 = vunpack.c.l.b16 %v120
  %v137 = vunpack.c.l.b16 %v121
  %v138 = vunpack.c.l.b16 %v122
  %v139 = vunpack.c.l.b16 %v123
  %v140 = vunpack.c.l.b16 %v124
  %v141 = vunpack.c.l.b16 %v125
  %v142 = vunpack.c.l.b16 %v126
  %v143 = vpack.c.b16 %v136, %v135
  %v144 = vpack.c.b16 %v138, %v137
  %v145 = vpack.c.b16 %v140, %v139
  %v146 = vpack.c.b16 %v142, %v141
  %vm151 = vcmask 523264
  %v153 = vsel %vm151, %v117, 0
  %v156 = vsel %vm151, %v118, 0
  %158 = vmatprep.subr.bf16.mxu0 0
  %159 = vmatpush1.bf16.msra.mxu0 %v143
  %160 = vmatprep.subr.bf16.mxu0 0
  %161 = vmatpush1.bf16.msra.mxu0 %v144
  %162 = vmatprep.subr.bf16.mxu0 0
  %163 = vmatpush1.bf16.msra.mxu0 %v145
  %164 = vmatprep.subr.bf16.mxu0 0
  %165 = vmatpush1.bf16.msra.mxu0 %v146
  %166 = vmatprep.subr.bf16.mxu0 0
  %167 = vmatpush1.bf16.msra.mxu0 0
  %168 = vmatprep.subr.bf16.mxu0 0
  %169 = vmatpush1.bf16.msra.mxu0 0
  %170 = vmatprep.subr.bf16.mxu0 0
  %171 = vmatpush1.bf16.msra.mxu0 0
  %172 = vmatprep.subr.bf16.mxu0 0
  %173 = vmatpush1.bf16.msra.mxu0 0
  %174 = vmatprep.subr.bf16.mxu0 0
  %175 = vmatpush1.bf16.msra.mxu0 0
  %176 = vmatprep.subr.bf16.mxu0 0
  %177 = vmatpush1.bf16.msra.mxu0 0
  %178 = vmatprep.subr.bf16.mxu0 0
  %179 = vmatpush1.bf16.msra.mxu0 0
  %180 = vmatprep.subr.bf16.mxu0 0
  %181 = vmatpush1.bf16.msra.mxu0 0
  %182 = vmatprep.subr.bf16.mxu0 0
  %183 = vmatpush1.bf16.msra.mxu0 0
  %184 = vmatprep.subr.bf16.mxu0 0
  %185 = vmatpush1.bf16.msra.mxu0 0
  %186 = vmatprep.subr.bf16.mxu0 0
  %187 = vmatpush1.bf16.msra.mxu0 0
  %188 = vmatprep.subr.bf16.mxu0 0
  %189 = vmatpush1.bf16.msra.mxu0 0
  %190 = vmatprep.mubr.bf16.mxu0 0
  %191 = vmatmul.mubr.bf16.gmra.mrb[0].mxu0 %v153
  %v192 = vpop.f32.mrb[0].mxu0
  %v193 = vadd.f32 0.0, %v192
  %v194 = vpop.f32.mrb[0].mxu0
  %v195 = vpop.f32.mrb[0].mxu0
  %v196 = vadd.f32 0.0, %v195
  %v197 = vpop.f32.mrb[0].mxu0
  %198 = vmatprep.mubr.bf16.mxu0 0
  %199 = vmatmul.mubr.bf16.gmra.mrb[0].mxu0 %v156
  %v200 = vpop.f32.mrb[0].mxu0
  %v201 = vadd.f32 0.0, %v200
  %v202 = vpop.f32.mrb[0].mxu0
  %v203 = vpop.f32.mrb[0].mxu0
  %v204 = vadd.f32 0.0, %v203
  %v205 = vpop.f32.mrb[0].mxu0
  %206 = vdwg.mxu0
  %s207 = scalar_lea.vmem %s1, 32
  %v208 = vld [vmem:[%s207] sm:$0xf]
  %v209 = vld [vmem:[%s207 + $0x4] sm:$0xf]
  %v210 = vld [vmem:[%s207 + $0x8] sm:$0xf]
  %v211 = vld [vmem:[%s207 + $0xc] sm:$0xf]
  %v212 = vld [vmem:[%s207 + $0x10] sm:$0xf]
  %v213 = vld [vmem:[%s207 + $0x14] sm:$0xf]
  %v214 = vld [vmem:[%s207 + $0x18] sm:$0xf]
  %v215 = vld [vmem:[%s207 + $0x1c] sm:$0xf]
  %v224 = vunpack.c.l.b16 %v208
  %v225 = vunpack.c.l.b16 %v209
  %v226 = vunpack.c.l.b16 %v210
  %v227 = vunpack.c.l.b16 %v211
  %v228 = vunpack.c.l.b16 %v212
  %v229 = vunpack.c.l.b16 %v213
  %v230 = vunpack.c.l.b16 %v214
  %v231 = vunpack.c.l.b16 %v215
  %v232 = vpack.c.b16 %v225, %v224
  %v233 = vpack.c.b16 %v227, %v226
  %v234 = vpack.c.b16 %v229, %v228
  %v235 = vpack.c.b16 %v231, %v230
  %240 = vmatprep.subr.bf16.mxu0 0
  %241 = vmatpush1.bf16.msra.mxu0 %v232
  %242 = vmatprep.subr.bf16.mxu0 0
  %243 = vmatpush1.bf16.msra.mxu0 %v233
  %244 = vmatprep.subr.bf16.mxu0 0
  %245 = vmatpush1.bf16.msra.mxu0 %v234
  %246 = vmatprep.subr.bf16.mxu0 0
  %247 = vmatpush1.bf16.msra.mxu0 %v235
  %248 = vmatprep.subr.bf16.mxu0 0
  %249 = vmatpush1.bf16.msra.mxu0 0
  %250 = vmatprep.subr.bf16.mxu0 0
  %251 = vmatpush1.bf16.msra.mxu0 0
  %252 = vmatprep.subr.bf16.mxu0 0
  %253 = vmatpush1.bf16.msra.mxu0 0
  %254 = vmatprep.subr.bf16.mxu0 0
  %255 = vmatpush1.bf16.msra.mxu0 0
  %256 = vmatprep.subr.bf16.mxu0 0
  %257 = vmatpush1.bf16.msra.mxu0 0
  %258 = vmatprep.subr.bf16.mxu0 0
  %259 = vmatpush1.bf16.msra.mxu0 0
  %260 = vmatprep.subr.bf16.mxu0 0
  %261 = vmatpush1.bf16.msra.mxu0 0
  %262 = vmatprep.subr.bf16.mxu0 0
  %263 = vmatpush1.bf16.msra.mxu0 0
  %264 = vmatprep.subr.bf16.mxu0 0
  %265 = vmatpush1.bf16.msra.mxu0 0
  %266 = vmatprep.subr.bf16.mxu0 0
  %267 = vmatpush1.bf16.msra.mxu0 0
  %268 = vmatprep.subr.bf16.mxu0 0
  %269 = vmatpush1.bf16.msra.mxu0 0
  %270 = vmatprep.subr.bf16.mxu0 0
  %271 = vmatpush1.bf16.msra.mxu0 0
  %272 = vmatprep.mubr.bf16.mxu0 0
  %273 = vmatmul.mubr.bf16.gmra.mrb[0].mxu0 %v153
  %v274 = vpop.f32.mrb[0].mxu0
  %v275 = vadd.f32 0.0, %v274
  %v276 = vpop.f32.mrb[0].mxu0
  %v277 = vpop.f32.mrb[0].mxu0
  %v278 = vadd.f32 0.0, %v277
  %v279 = vpop.f32.mrb[0].mxu0
  %280 = vmatprep.mubr.bf16.mxu0 0
  %281 = vmatmul.mubr.bf16.gmra.mrb[0].mxu0 %v156
  %v282 = vpop.f32.mrb[0].mxu0
  %v283 = vadd.f32 0.0, %v282
  %v284 = vpop.f32.mrb[0].mxu0
  %v285 = vpop.f32.mrb[0].mxu0
  %v286 = vadd.f32 0.0, %v285
  %v287 = vpop.f32.mrb[0].mxu0
  %288 = vdwg.mxu0
  %s289 = scalar_lea.vmem %s1, 64
  %v290 = vld [vmem:[%s289] sm:$0xf]
  %v291 = vld [vmem:[%s289 + $0x4] sm:$0xf]
  %v292 = vld [vmem:[%s289 + $0x8] sm:$0xf]
  %v293 = vld [vmem:[%s289 + $0xc] sm:$0xf]
  %v294 = vld [vmem:[%s289 + $0x10] sm:$0xf]
  %v295 = vld [vmem:[%s289 + $0x14] sm:$0xf]
  %v296 = vld [vmem:[%s289 + $0x18] sm:$0xf]
  %v297 = vld [vmem:[%s289 + $0x1c] sm:$0xf]
  %v306 = vunpack.c.l.b16 %v290
  %v307 = vunpack.c.l.b16 %v291
  %v308 = vunpack.c.l.b16 %v292
  %v309 = vunpack.c.l.b16 %v293
  %v310 = vunpack.c.l.b16 %v294
  %v311 = vunpack.c.l.b16 %v295
  %v312 = vunpack.c.l.b16 %v296
  %v313 = vunpack.c.l.b16 %v297
  %v314 = vpack.c.b16 %v307, %v306
  %v315 = vpack.c.b16 %v309, %v308
  %v316 = vpack.c.b16 %v311, %v310
  %v317 = vpack.c.b16 %v313, %v312
  %322 = vmatprep.subr.bf16.mxu0 0
  %323 = vmatpush1.bf16.msra.mxu0 %v314
  %324 = vmatprep.subr.bf16.mxu0 0
  %325 = vmatpush1.bf16.msra.mxu0 %v315
  %326 = vmatprep.subr.bf16.mxu0 0
  %327 = vmatpush1.bf16.msra.mxu0 %v316
  %328 = vmatprep.subr.bf16.mxu0 0
  %329 = vmatpush1.bf16.msra.mxu0 %v317
  %330 = vmatprep.subr.bf16.mxu0 0
  %331 = vmatpush1.bf16.msra.mxu0 0
  %332 = vmatprep.subr.bf16.mxu0 0
  %333 = vmatpush1.bf16.msra.mxu0 0
  %334 = vmatprep.subr.bf16.mxu0 0
  %335 = vmatpush1.bf16.msra.mxu0 0
  %336 = vmatprep.subr.bf16.mxu0 0
  %337 = vmatpush1.bf16.msra.mxu0 0
  %338 = vmatprep.subr.bf16.mxu0 0
  %339 = vmatpush1.bf16.msra.mxu0 0
  %340 = vmatprep.subr.bf16.mxu0 0
  %341 = vmatpush1.bf16.msra.mxu0 0
  %342 = vmatprep.subr.bf16.mxu0 0
  %343 = vmatpush1.bf16.msra.mxu0 0
  %344 = vmatprep.subr.bf16.mxu0 0
  %345 = vmatpush1.bf16.msra.mxu0 0
  %346 = vmatprep.subr.bf16.mxu0 0
  %347 = vmatpush1.bf16.msra.mxu0 0
  %348 = vmatprep.subr.bf16.mxu0 0
  %349 = vmatpush1.bf16.msra.mxu0 0
  %350 = vmatprep.subr.bf16.mxu0 0
  %351 = vmatpush1.bf16.msra.mxu0 0
  %352 = vmatprep.subr.bf16.mxu0 0
  %353 = vmatpush1.bf16.msra.mxu0 0
  %354 = vmatprep.mubr.bf16.mxu0 0
  %355 = vmatmul.mubr.bf16.gmra.mrb[0].mxu0 %v153
  %v356 = vpop.f32.mrb[0].mxu0
  %v357 = vadd.f32 0.0, %v356
  %v358 = vpop.f32.mrb[0].mxu0
  %v359 = vpop.f32.mrb[0].mxu0
  %v360 = vadd.f32 0.0, %v359
  %v361 = vpop.f32.mrb[0].mxu0
  %362 = vmatprep.mubr.bf16.mxu0 0
  %363 = vmatmul.mubr.bf16.gmra.mrb[0].mxu0 %v156
  %v364 = vpop.f32.mrb[0].mxu0
  %v365 = vadd.f32 0.0, %v364
  %v366 = vpop.f32.mrb[0].mxu0
  %v367 = vpop.f32.mrb[0].mxu0
  %v368 = vadd.f32 0.0, %v367
  %v369 = vpop.f32.mrb[0].mxu0
  %370 = vdwg.mxu0
  %v371 = vrot.slane %v193, 7
  %v372 = vrot.slane %v196, 7
  %v373 = vrot.slane %v201, 7
  %v374 = vrot.slane %v204, 7
  %vm375 = vcmp.lt.s32.totalorder %v37, 1
  %v376 = vsel %vm375, %v373, %v374
  %v377 = vsel %vm375, %v372, %v373
  %v378 = vsel %vm375, %v371, %v372
  %v379 = vsel %vm375, %v374, %v371
  %v380 = vmul.f32 %v379, %v97
  %v381 = vmul.f32 %v378, %v98
  %v382 = vmul.f32 %v377, %v99
  %v383 = vmul.f32 %v376, %v100
  %v384 = vadd.f32 %v380, %v275
  %v385 = vadd.f32 %v381, %v278
  %v386 = vadd.f32 %v382, %v283
  %v387 = vadd.f32 %v383, %v286
  %v388 = vrot.slane %v357, 1
  %v389 = vrot.slane %v360, 1
  %v390 = vrot.slane %v365, 1
  %v391 = vrot.slane %v368, 1
  %vm392 = vcmp.lt.s32.totalorder %v37, 7
  %v393 = vsel %vm392, %v390, %v391
  %v394 = vsel %vm392, %v389, %v390
  %v395 = vsel %vm392, %v388, %v389
  %v396 = vsel %vm392, %v391, %v388
  %v397 = vmul.f32 %v395, %v109
  %v398 = vmul.f32 %v394, %v110
  %v399 = vmul.f32 %v393, %v111
  %v400 = vmul.f32 %v396, %v112
  %v401 = vadd.f32 %v384, %v397
  %v402 = vadd.f32 %v385, %v398
  %v403 = vadd.f32 %v386, %v399
  %v404 = vadd.f32 %v387, %v400
  %v405 = vld [vmem:[%s2] sm:$0x1]
  %v407 = vlaneseq
  %v408 = vshrl.u32 %v407, 7
  %v409 = vsub.s32 0, %v408
  %v410 = vrot.slane %v405, %v409
  %v412 = vadd.f32 %v401, %v410
  %v413 = vadd.f32 %v402, %v410
  %v414 = vadd.f32 %v403, %v410
  %v415 = vadd.f32 %v404, %v410
  %vm416 = vcmp.ge.f32.partialorder %v412, 0.0
  %vm417 = vcmp.ge.f32.partialorder %v413, 0.0
  %vm418 = vcmp.ge.f32.partialorder %v414, 0.0
  %vm419 = vcmp.ge.f32.partialorder %v415, 0.0
  %v420 = vld [vmem:[%s3] sm:$0x1]
  %v422 = vlaneseq
  %v423 = vshrl.u32 %v422, 7
  %v424 = vsub.s32 0, %v423
  %v425 = vrot.slane %v420, %v424
  %v427 = vmul.f32 %v425, %v412
  %v428 = vmul.f32 %v425, %v413
  %v429 = vmul.f32 %v425, %v414
  %v430 = vmul.f32 %v425, %v415
  %v431 = vsel %vm416, %v412, %v427
  %v432 = vsel %vm417, %v413, %v428
  %v433 = vsel %vm418, %v414, %v429
  %v434 = vsel %vm419, %v415, %v430
  %435 = vst [vmem:[%s10] sm:$0xff] %v431
  %436 = vst [vmem:[%s10 + $0x8] sm:$0xff] %v432
  %437 = vst [vmem:[%s10 + $0x10] sm:$0xff] %v433
  %438 = vst [vmem:[%s10 + $0x18] sm:$0xff] %v434
  %v439 = vpack.c.bf16 %v432, %v431
  %v440 = vpack.c.bf16 %v434, %v433
  %v441 = vld [vmem:[%s4] sm:$0xf]
  %v442 = vld [vmem:[%s4 + $0x4] sm:$0xf]
  %v443 = vld [vmem:[%s4 + $0x8] sm:$0xf]
  %v444 = vld [vmem:[%s4 + $0xc] sm:$0xf]
  %v445 = vld [vmem:[%s4 + $0x10] sm:$0xf]
  %v446 = vld [vmem:[%s4 + $0x14] sm:$0xf]
  %v447 = vld [vmem:[%s4 + $0x18] sm:$0xf]
  %v448 = vld [vmem:[%s4 + $0x1c] sm:$0xf]
  %v449 = vld [vmem:[%s4 + $0x20] sm:$0xf]
  %v450 = vld [vmem:[%s4 + $0x24] sm:$0xf]
  %v451 = vld [vmem:[%s4 + $0x28] sm:$0xf]
  %v452 = vld [vmem:[%s4 + $0x2c] sm:$0xf]
  %v453 = vld [vmem:[%s4 + $0x30] sm:$0xf]
  %v454 = vld [vmem:[%s4 + $0x34] sm:$0xf]
  %v455 = vld [vmem:[%s4 + $0x38] sm:$0xf]
  %v456 = vld [vmem:[%s4 + $0x3c] sm:$0xf]
  %v473 = vunpack.c.l.b16 %v441
  %v474 = vunpack.c.l.b16 %v442
  %v475 = vunpack.c.l.b16 %v443
  %v476 = vunpack.c.l.b16 %v444
  %v477 = vunpack.c.l.b16 %v445
  %v478 = vunpack.c.l.b16 %v446
  %v479 = vunpack.c.l.b16 %v447
  %v480 = vunpack.c.l.b16 %v448
  %v481 = vunpack.c.l.b16 %v449
  %v482 = vunpack.c.l.b16 %v450
  %v483 = vunpack.c.l.b16 %v451
  %v484 = vunpack.c.l.b16 %v452
  %v485 = vunpack.c.l.b16 %v453
  %v486 = vunpack.c.l.b16 %v454
  %v487 = vunpack.c.l.b16 %v455
  %v488 = vunpack.c.l.b16 %v456
  %v489 = vpack.c.b16 %v474, %v473
  %v490 = vpack.c.b16 %v476, %v475
  %v491 = vpack.c.b16 %v478, %v477
  %v492 = vpack.c.b16 %v480, %v479
  %v493 = vpack.c.b16 %v482, %v481
  %v494 = vpack.c.b16 %v484, %v483
  %v495 = vpack.c.b16 %v486, %v485
  %v496 = vpack.c.b16 %v488, %v487
  %505 = vmatprep.subr.bf16.mxu0 0
  %506 = vmatpush1.bf16.msra.mxu0 %v489
  %507 = vmatprep.subr.bf16.mxu0 0
  %508 = vmatpush1.bf16.msra.mxu0 %v490
  %509 = vmatprep.subr.bf16.mxu0 0
  %510 = vmatpush1.bf16.msra.mxu0 %v491
  %511 = vmatprep.subr.bf16.mxu0 0
  %512 = vmatpush1.bf16.msra.mxu0 %v492
  %513 = vmatprep.subr.bf16.mxu0 0
  %514 = vmatpush1.bf16.msra.mxu0 %v493
  %515 = vmatprep.subr.bf16.mxu0 0
  %516 = vmatpush1.bf16.msra.mxu0 %v494
  %517 = vmatprep.subr.bf16.mxu0 0
  %518 = vmatpush1.bf16.msra.mxu0 %v495
  %519 = vmatprep.subr.bf16.mxu0 0
  %520 = vmatpush1.bf16.msra.mxu0 %v496
  %521 = vmatprep.subr.bf16.mxu0 0
  %522 = vmatpush1.bf16.msra.mxu0 0
  %523 = vmatprep.subr.bf16.mxu0 0
  %524 = vmatpush1.bf16.msra.mxu0 0
  %525 = vmatprep.subr.bf16.mxu0 0
  %526 = vmatpush1.bf16.msra.mxu0 0
  %527 = vmatprep.subr.bf16.mxu0 0
  %528 = vmatpush1.bf16.msra.mxu0 0
  %529 = vmatprep.subr.bf16.mxu0 0
  %530 = vmatpush1.bf16.msra.mxu0 0
  %531 = vmatprep.subr.bf16.mxu0 0
  %532 = vmatpush1.bf16.msra.mxu0 0
  %533 = vmatprep.subr.bf16.mxu0 0
  %534 = vmatpush1.bf16.msra.mxu0 0
  %535 = vmatprep.subr.bf16.mxu0 0
  %536 = vmatpush1.bf16.msra.mxu0 0
  %537 = vmatprep.mubr.bf16.mxu0 0
  %538 = vmatmul.mubr.bf16.gmra.mrb[0].mxu0 %v439
  %v539 = vpop.f32.mrb[0].mxu0
  %v540 = vadd.f32 0.0, %v539
  %v541 = vpop.f32.mrb[0].mxu0
  %v542 = vpop.f32.mrb[0].mxu0
  %v543 = vadd.f32 0.0, %v542
  %v544 = vpop.f32.mrb[0].mxu0
  %545 = vmatprep.mubr.bf16.mxu0 0
  %546 = vmatmul.mubr.bf16.gmra.mrb[0].mxu0 %v440
  %v547 = vpop.f32.mrb[0].mxu0
  %v548 = vadd.f32 0.0, %v547
  %v549 = vpop.f32.mrb[0].mxu0
  %v550 = vpop.f32.mrb[0].mxu0
  %v551 = vadd.f32 0.0, %v550
  %v552 = vpop.f32.mrb[0].mxu0
  %553 = vdwg.mxu0
  %s554 = scalar_lea.vmem %s4, 64
  %v555 = vld [vmem:[%s554] sm:$0xf]
  %v556 = vld [vmem:[%s554 + $0x4] sm:$0xf]
  %v557 = vld [vmem:[%s554 + $0x8] sm:$0xf]
  %v558 = vld [vmem:[%s554 + $0xc] sm:$0xf]
  %v559 = vld [vmem:[%s554 + $0x10] sm:$0xf]
  %v560 = vld [vmem:[%s554 + $0x14] sm:$0xf]
  %v561 = vld [vmem:[%s554 + $0x18] sm:$0xf]
  %v562 = vld [vmem:[%s554 + $0x1c] sm:$0xf]
  %v563 = vld [vmem:[%s554 + $0x20] sm:$0xf]
  %v564 = vld [vmem:[%s554 + $0x24] sm:$0xf]
  %v565 = vld [vmem:[%s554 + $0x28] sm:$0xf]
  %v566 = vld [vmem:[%s554 + $0x2c] sm:$0xf]
  %v567 = vld [vmem:[%s554 + $0x30] sm:$0xf]
  %v568 = vld [vmem:[%s554 + $0x34] sm:$0xf]
  %v569 = vld [vmem:[%s554 + $0x38] sm:$0xf]
  %v570 = vld [vmem:[%s554 + $0x3c] sm:$0xf]
  %v587 = vunpack.c.l.b16 %v555
  %v588 = vunpack.c.l.b16 %v556
  %v589 = vunpack.c.l.b16 %v557
  %v590 = vunpack.c.l.b16 %v558
  %v591 = vunpack.c.l.b16 %v559
  %v592 = vunpack.c.l.b16 %v560
  %v593 = vunpack.c.l.b16 %v561
  %v594 = vunpack.c.l.b16 %v562
  %v595 = vunpack.c.l.b16 %v563
  %v596 = vunpack.c.l.b16 %v564
  %v597 = vunpack.c.l.b16 %v565
  %v598 = vunpack.c.l.b16 %v566
  %v599 = vunpack.c.l.b16 %v567
  %v600 = vunpack.c.l.b16 %v568
  %v601 = vunpack.c.l.b16 %v569
  %v602 = vunpack.c.l.b16 %v570
  %v603 = vpack.c.b16 %v588, %v587
  %v604 = vpack.c.b16 %v590, %v589
  %v605 = vpack.c.b16 %v592, %v591
  %v606 = vpack.c.b16 %v594, %v593
  %v607 = vpack.c.b16 %v596, %v595
  %v608 = vpack.c.b16 %v598, %v597
  %v609 = vpack.c.b16 %v600, %v599
  %v610 = vpack.c.b16 %v602, %v601
  %619 = vmatprep.subr.bf16.mxu0 0
  %620 = vmatpush1.bf16.msra.mxu0 %v603
  %621 = vmatprep.subr.bf16.mxu0 0
  %622 = vmatpush1.bf16.msra.mxu0 %v604
  %623 = vmatprep.subr.bf16.mxu0 0
  %624 = vmatpush1.bf16.msra.mxu0 %v605
  %625 = vmatprep.subr.bf16.mxu0 0
  %626 = vmatpush1.bf16.msra.mxu0 %v606
  %627 = vmatprep.subr.bf16.mxu0 0
  %628 = vmatpush1.bf16.msra.mxu0 %v607
  %629 = vmatprep.subr.bf16.mxu0 0
  %630 = vmatpush1.bf16.msra.mxu0 %v608
  %631 = vmatprep.subr.bf16.mxu0 0
  %632 = vmatpush1.bf16.msra.mxu0 %v609
  %633 = vmatprep.subr.bf16.mxu0 0
  %634 = vmatpush1.bf16.msra.mxu0 %v610
  %635 = vmatprep.subr.bf16.mxu0 0
  %636 = vmatpush1.bf16.msra.mxu0 0
  %637 = vmatprep.subr.bf16.mxu0 0
  %638 = vmatpush1.bf16.msra.mxu0 0
  %639 = vmatprep.subr.bf16.mxu0 0
  %640 = vmatpush1.bf16.msra.mxu0 0
  %641 = vmatprep.subr.bf16.mxu0 0
  %642 = vmatpush1.bf16.msra.mxu0 0
  %643 = vmatprep.subr.bf16.mxu0 0
  %644 = vmatpush1.bf16.msra.mxu0 0
  %645 = vmatprep.subr.bf16.mxu0 0
  %646 = vmatpush1.bf16.msra.mxu0 0
  %647 = vmatprep.subr.bf16.mxu0 0
  %648 = vmatpush1.bf16.msra.mxu0 0
  %649 = vmatprep.subr.bf16.mxu0 0
  %650 = vmatpush1.bf16.msra.mxu0 0
  %651 = vmatprep.mubr.bf16.mxu0 0
  %652 = vmatmul.mubr.bf16.gmra.mrb[0].mxu0 %v439
  %v653 = vpop.f32.mrb[0].mxu0
  %v654 = vadd.f32 0.0, %v653
  %v655 = vpop.f32.mrb[0].mxu0
  %v656 = vpop.f32.mrb[0].mxu0
  %v657 = vadd.f32 0.0, %v656
  %v658 = vpop.f32.mrb[0].mxu0
  %659 = vmatprep.mubr.bf16.mxu0 0
  %660 = vmatmul.mubr.bf16.gmra.mrb[0].mxu0 %v440
  %v661 = vpop.f32.mrb[0].mxu0
  %v662 = vadd.f32 0.0, %v661
  %v663 = vpop.f32.mrb[0].mxu0
  %v664 = vpop.f32.mrb[0].mxu0
  %v665 = vadd.f32 0.0, %v664
  %v666 = vpop.f32.mrb[0].mxu0
  %667 = vdwg.mxu0
  %s668 = scalar_lea.vmem %s4, 128
  %v669 = vld [vmem:[%s668] sm:$0xf]
  %v670 = vld [vmem:[%s668 + $0x4] sm:$0xf]
  %v671 = vld [vmem:[%s668 + $0x8] sm:$0xf]
  %v672 = vld [vmem:[%s668 + $0xc] sm:$0xf]
  %v673 = vld [vmem:[%s668 + $0x10] sm:$0xf]
  %v674 = vld [vmem:[%s668 + $0x14] sm:$0xf]
  %v675 = vld [vmem:[%s668 + $0x18] sm:$0xf]
  %v676 = vld [vmem:[%s668 + $0x1c] sm:$0xf]
  %v677 = vld [vmem:[%s668 + $0x20] sm:$0xf]
  %v678 = vld [vmem:[%s668 + $0x24] sm:$0xf]
  %v679 = vld [vmem:[%s668 + $0x28] sm:$0xf]
  %v680 = vld [vmem:[%s668 + $0x2c] sm:$0xf]
  %v681 = vld [vmem:[%s668 + $0x30] sm:$0xf]
  %v682 = vld [vmem:[%s668 + $0x34] sm:$0xf]
  %v683 = vld [vmem:[%s668 + $0x38] sm:$0xf]
  %v684 = vld [vmem:[%s668 + $0x3c] sm:$0xf]
  %v701 = vunpack.c.l.b16 %v669
  %v702 = vunpack.c.l.b16 %v670
  %v703 = vunpack.c.l.b16 %v671
  %v704 = vunpack.c.l.b16 %v672
  %v705 = vunpack.c.l.b16 %v673
  %v706 = vunpack.c.l.b16 %v674
  %v707 = vunpack.c.l.b16 %v675
  %v708 = vunpack.c.l.b16 %v676
  %v709 = vunpack.c.l.b16 %v677
  %v710 = vunpack.c.l.b16 %v678
  %v711 = vunpack.c.l.b16 %v679
  %v712 = vunpack.c.l.b16 %v680
  %v713 = vunpack.c.l.b16 %v681
  %v714 = vunpack.c.l.b16 %v682
  %v715 = vunpack.c.l.b16 %v683
  %v716 = vunpack.c.l.b16 %v684
  %v717 = vpack.c.b16 %v702, %v701
  %v718 = vpack.c.b16 %v704, %v703
  %v719 = vpack.c.b16 %v706, %v705
  %v720 = vpack.c.b16 %v708, %v707
  %v721 = vpack.c.b16 %v710, %v709
  %v722 = vpack.c.b16 %v712, %v711
  %v723 = vpack.c.b16 %v714, %v713
  %v724 = vpack.c.b16 %v716, %v715
  %733 = vmatprep.subr.bf16.mxu0 0
  %734 = vmatpush1.bf16.msra.mxu0 %v717
  %735 = vmatprep.subr.bf16.mxu0 0
  %736 = vmatpush1.bf16.msra.mxu0 %v718
  %737 = vmatprep.subr.bf16.mxu0 0
  %738 = vmatpush1.bf16.msra.mxu0 %v719
  %739 = vmatprep.subr.bf16.mxu0 0
  %740 = vmatpush1.bf16.msra.mxu0 %v720
  %741 = vmatprep.subr.bf16.mxu0 0
  %742 = vmatpush1.bf16.msra.mxu0 %v721
  %743 = vmatprep.subr.bf16.mxu0 0
  %744 = vmatpush1.bf16.msra.mxu0 %v722
  %745 = vmatprep.subr.bf16.mxu0 0
  %746 = vmatpush1.bf16.msra.mxu0 %v723
  %747 = vmatprep.subr.bf16.mxu0 0
  %748 = vmatpush1.bf16.msra.mxu0 %v724
  %749 = vmatprep.subr.bf16.mxu0 0
  %750 = vmatpush1.bf16.msra.mxu0 0
  %751 = vmatprep.subr.bf16.mxu0 0
  %752 = vmatpush1.bf16.msra.mxu0 0
  %753 = vmatprep.subr.bf16.mxu0 0
  %754 = vmatpush1.bf16.msra.mxu0 0
  %755 = vmatprep.subr.bf16.mxu0 0
  %756 = vmatpush1.bf16.msra.mxu0 0
  %757 = vmatprep.subr.bf16.mxu0 0
  %758 = vmatpush1.bf16.msra.mxu0 0
  %759 = vmatprep.subr.bf16.mxu0 0
  %760 = vmatpush1.bf16.msra.mxu0 0
  %761 = vmatprep.subr.bf16.mxu0 0
  %762 = vmatpush1.bf16.msra.mxu0 0
  %763 = vmatprep.subr.bf16.mxu0 0
  %764 = vmatpush1.bf16.msra.mxu0 0
  %765 = vmatprep.mubr.bf16.mxu0 0
  %766 = vmatmul.mubr.bf16.gmra.mrb[0].mxu0 %v439
  %v767 = vpop.f32.mrb[0].mxu0
  %v768 = vadd.f32 0.0, %v767
  %v769 = vpop.f32.mrb[0].mxu0
  %v770 = vpop.f32.mrb[0].mxu0
  %v771 = vadd.f32 0.0, %v770
  %v772 = vpop.f32.mrb[0].mxu0
  %773 = vmatprep.mubr.bf16.mxu0 0
  %774 = vmatmul.mubr.bf16.gmra.mrb[0].mxu0 %v440
  %v775 = vpop.f32.mrb[0].mxu0
  %v776 = vadd.f32 0.0, %v775
  %v777 = vpop.f32.mrb[0].mxu0
  %v778 = vpop.f32.mrb[0].mxu0
  %v779 = vadd.f32 0.0, %v778
  %v780 = vpop.f32.mrb[0].mxu0
  %781 = vdwg.mxu0
  %v782 = vrot.slane %v540, 7
  %v783 = vrot.slane %v543, 7
  %v784 = vrot.slane %v548, 7
  %v785 = vrot.slane %v551, 7
  %v786 = vsel %vm375, %v784, %v785
  %v787 = vsel %vm375, %v783, %v784
  %v788 = vsel %vm375, %v782, %v783
  %v789 = vsel %vm375, %v785, %v782
  %v790 = vmul.f32 %v789, %v97
  %v791 = vmul.f32 %v788, %v98
  %v792 = vmul.f32 %v787, %v99
  %v793 = vmul.f32 %v786, %v100
  %v794 = vadd.f32 %v790, %v654
  %v795 = vadd.f32 %v791, %v657
  %v796 = vadd.f32 %v792, %v662
  %v797 = vadd.f32 %v793, %v665
  %v798 = vrot.slane %v768, 1
  %v799 = vrot.slane %v771, 1
  %v800 = vrot.slane %v776, 1
  %v801 = vrot.slane %v779, 1
  %v802 = vsel %vm392, %v800, %v801
  %v803 = vsel %vm392, %v799, %v800
  %v804 = vsel %vm392, %v798, %v799
  %v805 = vsel %vm392, %v801, %v798
  %v806 = vmul.f32 %v804, %v109
  %v807 = vmul.f32 %v803, %v110
  %v808 = vmul.f32 %v802, %v111
  %v809 = vmul.f32 %v805, %v112
  %v810 = vadd.f32 %v794, %v806
  %v811 = vadd.f32 %v795, %v807
  %v812 = vadd.f32 %v796, %v808
  %v813 = vadd.f32 %v797, %v809
  %v814 = vld [vmem:[%s5] sm:$0x1]
  %v816 = vlaneseq
  %v817 = vshrl.u32 %v816, 7
  %v818 = vsub.s32 0, %v817
  %v819 = vrot.slane %v814, %v818
  %v821 = vadd.f32 %v810, %v819
  %v822 = vadd.f32 %v811, %v819
  %v823 = vadd.f32 %v812, %v819
  %v824 = vadd.f32 %v813, %v819
  %vm825 = vcmp.ge.f32.partialorder %v821, 0.0
  %vm826 = vcmp.ge.f32.partialorder %v822, 0.0
  %vm827 = vcmp.ge.f32.partialorder %v823, 0.0
  %vm828 = vcmp.ge.f32.partialorder %v824, 0.0
  %v829 = vld [vmem:[%s6] sm:$0x1]
  %v831 = vlaneseq
  %v832 = vshrl.u32 %v831, 7
  %v833 = vsub.s32 0, %v832
  %v834 = vrot.slane %v829, %v833
  %v836 = vmul.f32 %v834, %v821
  %v837 = vmul.f32 %v834, %v822
  %v838 = vmul.f32 %v834, %v823
  %v839 = vmul.f32 %v834, %v824
  %v840 = vsel %vm825, %v821, %v836
  %v841 = vsel %vm826, %v822, %v837
  %v842 = vsel %vm827, %v823, %v838
  %v843 = vsel %vm828, %v824, %v839
  %s844 = scalar_lea.vmem %s10, 32
  %845 = vst [vmem:[%s844] sm:$0xff] %v840
  %846 = vst [vmem:[%s844 + $0x8] sm:$0xff] %v841
  %847 = vst [vmem:[%s844 + $0x10] sm:$0xff] %v842
  %848 = vst [vmem:[%s844 + $0x18] sm:$0xff] %v843
  %v849 = vpack.c.bf16 %v841, %v840
  %v850 = vpack.c.bf16 %v843, %v842
  %v851 = vld [vmem:[%s7] sm:$0xf]
  %v852 = vld [vmem:[%s7 + $0x4] sm:$0xf]
  %v853 = vld [vmem:[%s7 + $0x8] sm:$0xf]
  %v854 = vld [vmem:[%s7 + $0xc] sm:$0xf]
  %v855 = vld [vmem:[%s7 + $0x10] sm:$0xf]
  %v856 = vld [vmem:[%s7 + $0x14] sm:$0xf]
  %v857 = vld [vmem:[%s7 + $0x18] sm:$0xf]
  %v858 = vld [vmem:[%s7 + $0x1c] sm:$0xf]
  %v859 = vld [vmem:[%s7 + $0x20] sm:$0xf]
  %v860 = vld [vmem:[%s7 + $0x24] sm:$0xf]
  %v861 = vld [vmem:[%s7 + $0x28] sm:$0xf]
  %v862 = vld [vmem:[%s7 + $0x2c] sm:$0xf]
  %v863 = vld [vmem:[%s7 + $0x30] sm:$0xf]
  %v864 = vld [vmem:[%s7 + $0x34] sm:$0xf]
  %v865 = vld [vmem:[%s7 + $0x38] sm:$0xf]
  %v866 = vld [vmem:[%s7 + $0x3c] sm:$0xf]
  %v883 = vunpack.c.l.b16 %v851
  %v884 = vunpack.c.l.b16 %v852
  %v885 = vunpack.c.l.b16 %v853
  %v886 = vunpack.c.l.b16 %v854
  %v887 = vunpack.c.l.b16 %v855
  %v888 = vunpack.c.l.b16 %v856
  %v889 = vunpack.c.l.b16 %v857
  %v890 = vunpack.c.l.b16 %v858
  %v891 = vunpack.c.l.b16 %v859
  %v892 = vunpack.c.l.b16 %v860
  %v893 = vunpack.c.l.b16 %v861
  %v894 = vunpack.c.l.b16 %v862
  %v895 = vunpack.c.l.b16 %v863
  %v896 = vunpack.c.l.b16 %v864
  %v897 = vunpack.c.l.b16 %v865
  %v898 = vunpack.c.l.b16 %v866
  %v899 = vpack.c.b16 %v884, %v883
  %v900 = vpack.c.b16 %v886, %v885
  %v901 = vpack.c.b16 %v888, %v887
  %v902 = vpack.c.b16 %v890, %v889
  %v903 = vpack.c.b16 %v892, %v891
  %v904 = vpack.c.b16 %v894, %v893
  %v905 = vpack.c.b16 %v896, %v895
  %v906 = vpack.c.b16 %v898, %v897
  %915 = vmatprep.subr.bf16.mxu0 0
  %916 = vmatpush1.bf16.msra.mxu0 %v899
  %917 = vmatprep.subr.bf16.mxu0 0
  %918 = vmatpush1.bf16.msra.mxu0 %v900
  %919 = vmatprep.subr.bf16.mxu0 0
  %920 = vmatpush1.bf16.msra.mxu0 %v901
  %921 = vmatprep.subr.bf16.mxu0 0
  %922 = vmatpush1.bf16.msra.mxu0 %v902
  %923 = vmatprep.subr.bf16.mxu0 0
  %924 = vmatpush1.bf16.msra.mxu0 %v903
  %925 = vmatprep.subr.bf16.mxu0 0
  %926 = vmatpush1.bf16.msra.mxu0 %v904
  %927 = vmatprep.subr.bf16.mxu0 0
  %928 = vmatpush1.bf16.msra.mxu0 %v905
  %929 = vmatprep.subr.bf16.mxu0 0
  %930 = vmatpush1.bf16.msra.mxu0 %v906
  %931 = vmatprep.subr.bf16.mxu0 0
  %932 = vmatpush1.bf16.msra.mxu0 0
  %933 = vmatprep.subr.bf16.mxu0 0
  %934 = vmatpush1.bf16.msra.mxu0 0
  %935 = vmatprep.subr.bf16.mxu0 0
  %936 = vmatpush1.bf16.msra.mxu0 0
  %937 = vmatprep.subr.bf16.mxu0 0
  %938 = vmatpush1.bf16.msra.mxu0 0
  %939 = vmatprep.subr.bf16.mxu0 0
  %940 = vmatpush1.bf16.msra.mxu0 0
  %941 = vmatprep.subr.bf16.mxu0 0
  %942 = vmatpush1.bf16.msra.mxu0 0
  %943 = vmatprep.subr.bf16.mxu0 0
  %944 = vmatpush1.bf16.msra.mxu0 0
  %945 = vmatprep.subr.bf16.mxu0 0
  %946 = vmatpush1.bf16.msra.mxu0 0
  %947 = vmatprep.mubr.bf16.mxu0 0
  %948 = vmatmul.mubr.bf16.gmra.mrb[0].mxu0 %v849
  %v949 = vpop.f32.mrb[0].mxu0
  %v950 = vadd.f32 0.0, %v949
  %v951 = vpop.f32.mrb[0].mxu0
  %v952 = vpop.f32.mrb[0].mxu0
  %v953 = vadd.f32 0.0, %v952
  %v954 = vpop.f32.mrb[0].mxu0
  %955 = vmatprep.mubr.bf16.mxu0 0
  %956 = vmatmul.mubr.bf16.gmra.mrb[0].mxu0 %v850
  %v957 = vpop.f32.mrb[0].mxu0
  %v958 = vadd.f32 0.0, %v957
  %v959 = vpop.f32.mrb[0].mxu0
  %v960 = vpop.f32.mrb[0].mxu0
  %v961 = vadd.f32 0.0, %v960
  %v962 = vpop.f32.mrb[0].mxu0
  %963 = vdwg.mxu0
  %s964 = scalar_lea.vmem %s7, 64
  %v965 = vld [vmem:[%s964] sm:$0xf]
  %v966 = vld [vmem:[%s964 + $0x4] sm:$0xf]
  %v967 = vld [vmem:[%s964 + $0x8] sm:$0xf]
  %v968 = vld [vmem:[%s964 + $0xc] sm:$0xf]
  %v969 = vld [vmem:[%s964 + $0x10] sm:$0xf]
  %v970 = vld [vmem:[%s964 + $0x14] sm:$0xf]
  %v971 = vld [vmem:[%s964 + $0x18] sm:$0xf]
  %v972 = vld [vmem:[%s964 + $0x1c] sm:$0xf]
  %v973 = vld [vmem:[%s964 + $0x20] sm:$0xf]
  %v974 = vld [vmem:[%s964 + $0x24] sm:$0xf]
  %v975 = vld [vmem:[%s964 + $0x28] sm:$0xf]
  %v976 = vld [vmem:[%s964 + $0x2c] sm:$0xf]
  %v977 = vld [vmem:[%s964 + $0x30] sm:$0xf]
  %v978 = vld [vmem:[%s964 + $0x34] sm:$0xf]
  %v979 = vld [vmem:[%s964 + $0x38] sm:$0xf]
  %v980 = vld [vmem:[%s964 + $0x3c] sm:$0xf]
  %v997 = vunpack.c.l.b16 %v965
  %v998 = vunpack.c.l.b16 %v966
  %v999 = vunpack.c.l.b16 %v967
  %v1000 = vunpack.c.l.b16 %v968
  %v1001 = vunpack.c.l.b16 %v969
  %v1002 = vunpack.c.l.b16 %v970
  %v1003 = vunpack.c.l.b16 %v971
  %v1004 = vunpack.c.l.b16 %v972
  %v1005 = vunpack.c.l.b16 %v973
  %v1006 = vunpack.c.l.b16 %v974
  %v1007 = vunpack.c.l.b16 %v975
  %v1008 = vunpack.c.l.b16 %v976
  %v1009 = vunpack.c.l.b16 %v977
  %v1010 = vunpack.c.l.b16 %v978
  %v1011 = vunpack.c.l.b16 %v979
  %v1012 = vunpack.c.l.b16 %v980
  %v1013 = vpack.c.b16 %v998, %v997
  %v1014 = vpack.c.b16 %v1000, %v999
  %v1015 = vpack.c.b16 %v1002, %v1001
  %v1016 = vpack.c.b16 %v1004, %v1003
  %v1017 = vpack.c.b16 %v1006, %v1005
  %v1018 = vpack.c.b16 %v1008, %v1007
  %v1019 = vpack.c.b16 %v1010, %v1009
  %v1020 = vpack.c.b16 %v1012, %v1011
  %1029 = vmatprep.subr.bf16.mxu0 0
  %1030 = vmatpush1.bf16.msra.mxu0 %v1013
  %1031 = vmatprep.subr.bf16.mxu0 0
  %1032 = vmatpush1.bf16.msra.mxu0 %v1014
  %1033 = vmatprep.subr.bf16.mxu0 0
  %1034 = vmatpush1.bf16.msra.mxu0 %v1015
  %1035 = vmatprep.subr.bf16.mxu0 0
  %1036 = vmatpush1.bf16.msra.mxu0 %v1016
  %1037 = vmatprep.subr.bf16.mxu0 0
  %1038 = vmatpush1.bf16.msra.mxu0 %v1017
  %1039 = vmatprep.subr.bf16.mxu0 0
  %1040 = vmatpush1.bf16.msra.mxu0 %v1018
  %1041 = vmatprep.subr.bf16.mxu0 0
  %1042 = vmatpush1.bf16.msra.mxu0 %v1019
  %1043 = vmatprep.subr.bf16.mxu0 0
  %1044 = vmatpush1.bf16.msra.mxu0 %v1020
  %1045 = vmatprep.subr.bf16.mxu0 0
  %1046 = vmatpush1.bf16.msra.mxu0 0
  %1047 = vmatprep.subr.bf16.mxu0 0
  %1048 = vmatpush1.bf16.msra.mxu0 0
  %1049 = vmatprep.subr.bf16.mxu0 0
  %1050 = vmatpush1.bf16.msra.mxu0 0
  %1051 = vmatprep.subr.bf16.mxu0 0
  %1052 = vmatpush1.bf16.msra.mxu0 0
  %1053 = vmatprep.subr.bf16.mxu0 0
  %1054 = vmatpush1.bf16.msra.mxu0 0
  %1055 = vmatprep.subr.bf16.mxu0 0
  %1056 = vmatpush1.bf16.msra.mxu0 0
  %1057 = vmatprep.subr.bf16.mxu0 0
  %1058 = vmatpush1.bf16.msra.mxu0 0
  %1059 = vmatprep.subr.bf16.mxu0 0
  %1060 = vmatpush1.bf16.msra.mxu0 0
  %1061 = vmatprep.mubr.bf16.mxu0 0
  %1062 = vmatmul.mubr.bf16.gmra.mrb[0].mxu0 %v849
  %v1063 = vpop.f32.mrb[0].mxu0
  %v1064 = vadd.f32 0.0, %v1063
  %v1065 = vpop.f32.mrb[0].mxu0
  %v1066 = vpop.f32.mrb[0].mxu0
  %v1067 = vadd.f32 0.0, %v1066
  %v1068 = vpop.f32.mrb[0].mxu0
  %1069 = vmatprep.mubr.bf16.mxu0 0
  %1070 = vmatmul.mubr.bf16.gmra.mrb[0].mxu0 %v850
  %v1071 = vpop.f32.mrb[0].mxu0
  %v1072 = vadd.f32 0.0, %v1071
  %v1073 = vpop.f32.mrb[0].mxu0
  %v1074 = vpop.f32.mrb[0].mxu0
  %v1075 = vadd.f32 0.0, %v1074
  %v1076 = vpop.f32.mrb[0].mxu0
  %1077 = vdwg.mxu0
  %s1078 = scalar_lea.vmem %s7, 128
  %v1079 = vld [vmem:[%s1078] sm:$0xf]
  %v1080 = vld [vmem:[%s1078 + $0x4] sm:$0xf]
  %v1081 = vld [vmem:[%s1078 + $0x8] sm:$0xf]
  %v1082 = vld [vmem:[%s1078 + $0xc] sm:$0xf]
  %v1083 = vld [vmem:[%s1078 + $0x10] sm:$0xf]
  %v1084 = vld [vmem:[%s1078 + $0x14] sm:$0xf]
  %v1085 = vld [vmem:[%s1078 + $0x18] sm:$0xf]
  %v1086 = vld [vmem:[%s1078 + $0x1c] sm:$0xf]
  %v1087 = vld [vmem:[%s1078 + $0x20] sm:$0xf]
  %v1088 = vld [vmem:[%s1078 + $0x24] sm:$0xf]
  %v1089 = vld [vmem:[%s1078 + $0x28] sm:$0xf]
  %v1090 = vld [vmem:[%s1078 + $0x2c] sm:$0xf]
  %v1091 = vld [vmem:[%s1078 + $0x30] sm:$0xf]
  %v1092 = vld [vmem:[%s1078 + $0x34] sm:$0xf]
  %v1093 = vld [vmem:[%s1078 + $0x38] sm:$0xf]
  %v1094 = vld [vmem:[%s1078 + $0x3c] sm:$0xf]
  %v1111 = vunpack.c.l.b16 %v1079
  %v1112 = vunpack.c.l.b16 %v1080
  %v1113 = vunpack.c.l.b16 %v1081
  %v1114 = vunpack.c.l.b16 %v1082
  %v1115 = vunpack.c.l.b16 %v1083
  %v1116 = vunpack.c.l.b16 %v1084
  %v1117 = vunpack.c.l.b16 %v1085
  %v1118 = vunpack.c.l.b16 %v1086
  %v1119 = vunpack.c.l.b16 %v1087
  %v1120 = vunpack.c.l.b16 %v1088
  %v1121 = vunpack.c.l.b16 %v1089
  %v1122 = vunpack.c.l.b16 %v1090
  %v1123 = vunpack.c.l.b16 %v1091
  %v1124 = vunpack.c.l.b16 %v1092
  %v1125 = vunpack.c.l.b16 %v1093
  %v1126 = vunpack.c.l.b16 %v1094
  %v1127 = vpack.c.b16 %v1112, %v1111
  %v1128 = vpack.c.b16 %v1114, %v1113
  %v1129 = vpack.c.b16 %v1116, %v1115
  %v1130 = vpack.c.b16 %v1118, %v1117
  %v1131 = vpack.c.b16 %v1120, %v1119
  %v1132 = vpack.c.b16 %v1122, %v1121
  %v1133 = vpack.c.b16 %v1124, %v1123
  %v1134 = vpack.c.b16 %v1126, %v1125
  %1143 = vmatprep.subr.bf16.mxu0 0
  %1144 = vmatpush1.bf16.msra.mxu0 %v1127
  %1145 = vmatprep.subr.bf16.mxu0 0
  %1146 = vmatpush1.bf16.msra.mxu0 %v1128
  %1147 = vmatprep.subr.bf16.mxu0 0
  %1148 = vmatpush1.bf16.msra.mxu0 %v1129
  %1149 = vmatprep.subr.bf16.mxu0 0
  %1150 = vmatpush1.bf16.msra.mxu0 %v1130
  %1151 = vmatprep.subr.bf16.mxu0 0
  %1152 = vmatpush1.bf16.msra.mxu0 %v1131
  %1153 = vmatprep.subr.bf16.mxu0 0
  %1154 = vmatpush1.bf16.msra.mxu0 %v1132
  %1155 = vmatprep.subr.bf16.mxu0 0
  %1156 = vmatpush1.bf16.msra.mxu0 %v1133
  %1157 = vmatprep.subr.bf16.mxu0 0
  %1158 = vmatpush1.bf16.msra.mxu0 %v1134
  %1159 = vmatprep.subr.bf16.mxu0 0
  %1160 = vmatpush1.bf16.msra.mxu0 0
  %1161 = vmatprep.subr.bf16.mxu0 0
  %1162 = vmatpush1.bf16.msra.mxu0 0
  %1163 = vmatprep.subr.bf16.mxu0 0
  %1164 = vmatpush1.bf16.msra.mxu0 0
  %1165 = vmatprep.subr.bf16.mxu0 0
  %1166 = vmatpush1.bf16.msra.mxu0 0
  %1167 = vmatprep.subr.bf16.mxu0 0
  %1168 = vmatpush1.bf16.msra.mxu0 0
  %1169 = vmatprep.subr.bf16.mxu0 0
  %1170 = vmatpush1.bf16.msra.mxu0 0
  %1171 = vmatprep.subr.bf16.mxu0 0
  %1172 = vmatpush1.bf16.msra.mxu0 0
  %1173 = vmatprep.subr.bf16.mxu0 0
  %1174 = vmatpush1.bf16.msra.mxu0 0
  %1175 = vmatprep.mubr.bf16.mxu0 0
  %1176 = vmatmul.mubr.bf16.gmra.mrb[0].mxu0 %v849
  %v1177 = vpop.f32.mrb[0].mxu0
  %v1178 = vadd.f32 0.0, %v1177
  %v1179 = vpop.f32.mrb[0].mxu0
  %v1180 = vpop.f32.mrb[0].mxu0
  %v1181 = vadd.f32 0.0, %v1180
  %v1182 = vpop.f32.mrb[0].mxu0
  %1183 = vmatprep.mubr.bf16.mxu0 0
  %1184 = vmatmul.mubr.bf16.gmra.mrb[0].mxu0 %v850
  %v1185 = vpop.f32.mrb[0].mxu0
  %v1186 = vadd.f32 0.0, %v1185
  %v1187 = vpop.f32.mrb[0].mxu0
  %v1188 = vpop.f32.mrb[0].mxu0
  %v1189 = vadd.f32 0.0, %v1188
  %v1190 = vpop.f32.mrb[0].mxu0
  %1191 = vdwg.mxu0
  %v1192 = vrot.slane %v950, 7
  %v1193 = vrot.slane %v953, 7
  %v1194 = vrot.slane %v958, 7
  %v1195 = vrot.slane %v961, 7
  %v1196 = vsel %vm375, %v1194, %v1195
  %v1197 = vsel %vm375, %v1193, %v1194
  %v1198 = vsel %vm375, %v1192, %v1193
  %v1199 = vsel %vm375, %v1195, %v1192
  %v1200 = vmul.f32 %v1199, %v97
  %v1201 = vmul.f32 %v1198, %v98
  %v1202 = vmul.f32 %v1197, %v99
  %v1203 = vmul.f32 %v1196, %v100
  %v1204 = vadd.f32 %v1200, %v1064
  %v1205 = vadd.f32 %v1201, %v1067
  %v1206 = vadd.f32 %v1202, %v1072
  %v1207 = vadd.f32 %v1203, %v1075
  %v1208 = vrot.slane %v1178, 1
  %v1209 = vrot.slane %v1181, 1
  %v1210 = vrot.slane %v1186, 1
  %v1211 = vrot.slane %v1189, 1
  %v1212 = vsel %vm392, %v1210, %v1211
  %v1213 = vsel %vm392, %v1209, %v1210
  %v1214 = vsel %vm392, %v1208, %v1209
  %v1215 = vsel %vm392, %v1211, %v1208
  %v1216 = vmul.f32 %v1214, %v109
  %v1217 = vmul.f32 %v1213, %v110
  %v1218 = vmul.f32 %v1212, %v111
  %v1219 = vmul.f32 %v1215, %v112
  %v1220 = vadd.f32 %v1204, %v1216
  %v1221 = vadd.f32 %v1205, %v1217
  %v1222 = vadd.f32 %v1206, %v1218
  %v1223 = vadd.f32 %v1207, %v1219
  %v1224 = vld [vmem:[%s8] sm:$0x1]
  %v1226 = vlaneseq
  %v1227 = vshrl.u32 %v1226, 7
  %v1228 = vsub.s32 0, %v1227
  %v1229 = vrot.slane %v1224, %v1228
  %v1231 = vadd.f32 %v1220, %v1229
  %v1232 = vadd.f32 %v1221, %v1229
  %v1233 = vadd.f32 %v1222, %v1229
  %v1234 = vadd.f32 %v1223, %v1229
  %vm1235 = vcmp.ge.f32.partialorder %v1231, 0.0
  %vm1236 = vcmp.ge.f32.partialorder %v1232, 0.0
  %vm1237 = vcmp.ge.f32.partialorder %v1233, 0.0
  %vm1238 = vcmp.ge.f32.partialorder %v1234, 0.0
  %v1239 = vld [vmem:[%s9] sm:$0x1]
  %v1241 = vlaneseq
  %v1242 = vshrl.u32 %v1241, 7
  %v1243 = vsub.s32 0, %v1242
  %v1244 = vrot.slane %v1239, %v1243
  %v1246 = vmul.f32 %v1244, %v1231
  %v1247 = vmul.f32 %v1244, %v1232
  %v1248 = vmul.f32 %v1244, %v1233
  %v1249 = vmul.f32 %v1244, %v1234
  %v1250 = vsel %vm1235, %v1231, %v1246
  %v1251 = vsel %vm1236, %v1232, %v1247
  %v1252 = vsel %vm1237, %v1233, %v1248
  %v1253 = vsel %vm1238, %v1234, %v1249
  %s1254 = scalar_lea.vmem %s10, 64
  %1255 = vst [vmem:[%s1254] sm:$0xff] %v1250
  %1256 = vst [vmem:[%s1254 + $0x8] sm:$0xff] %v1251
  %1257 = vst [vmem:[%s1254 + $0x10] sm:$0xff] %v1252
  %1258 = vst [vmem:[%s1254 + $0x18] sm:$0xff] %v1253
  // Predicated region
  $region42: #{res_conv_block.1} parent=0 // pred_check
    _
  $region43: #{res_conv_block.1} parent=0 // pred_check_branch
    %1260 = sbr.rel (0) target = $region45
  $region44: #{res_conv_block.1} parent=0 // pred_region
    _
  $region45: #{res_conv_block.1} parent=0 // pred_fallthru
    _
  // Predicated region
  $region46: #{res_conv_block.1} parent=0 // pred_check
    _
  $region47: #{res_conv_block.1} parent=0 // pred_check_branch
    %1262 = sbr.rel (0) target = $region49
  $region48: #{res_conv_block.1} parent=0 // pred_region
    _
  $region49: #{res_conv_block.1} parent=0 // pred_fallthru
    _

</llo_original>
